<compile_context>
chip_gen: v7x
topology: tpu7x:2x2x1
jax: 0.10.0
libtpu: 0.0.40
codegen_flags: <defaults>
</compile_context>

<pallas_src>
import functools

import jax
import jax.numpy as jnp
from jax.experimental import pallas as pl
from jax.experimental.pallas import tpu as pltpu

HP = 128        # hidden_dim padded to one full lane width
OUT_PAD = 128   # out_dim padded to one full lane width


def _sigmoid(x):
    # sigmoid(x) == 0.5 * (1 + tanh(x/2)); tanh runs on the EUP, so the only
    # VALU work per gate is one mul + one add (no f32 divide on the chain).
    return 0.5 * jnp.tanh(0.5 * x) + 0.5


def decoder_kernel(x_ref, wih_ref, whh_ref, b_ref, wd_ref, bd_ref,
                   out_ref, hlast_ref, *, seq_len, n_features):
    """LSTM recurrence (seq_len steps, unrolled) + one fused dense projection."""
    B = x_ref.shape[0]
    Hp = HP

    # Loop-invariant MXU operands, cast to bf16 once (f32 accumulation below).
    whh = whh_ref[...].astype(jnp.bfloat16)          # (Hp, 4*Hp)
    wd = wd_ref[...].astype(jnp.bfloat16)            # (Hp, OUT_PAD)

    # Z.repeat makes the input identical at every timestep, so the input
    # contribution to the gates is loop-invariant.  K = n_features is tiny, so
    # compute it once on the VPU as broadcast FMAs (no MXU start-up latency).
    x = x_ref[...]                                    # (B, F)
    wih = wih_ref[...]                                # (F_pad, 4*Hp), extra rows are 0
    xg = jnp.broadcast_to(b_ref[...], (B, 4 * Hp))    # (B, 4*Hp)
    for k in range(n_features):
        xg = xg + x[:, k:k + 1] * wih[k:k + 1, :]

    hs = []

    # ---- step 0: h == 0, so gates == xg exactly; skip the recurrence matmul.
    # (f is irrelevant at step 0 because c == 0.)
    i_g = _sigmoid(xg[:, 0 * Hp:1 * Hp])
    g_g = jnp.tanh(xg[:, 2 * Hp:3 * Hp])
    o_g = _sigmoid(xg[:, 3 * Hp:4 * Hp])
    c = i_g * g_g
    h = o_g * jnp.tanh(c)
    hs.append(h)

    # ---- steps 1..S-1: full recurrence (static unroll; seq_len is small).
    for _ in range(1, seq_len):
        gates = xg + jnp.dot(h.astype(jnp.bfloat16), whh,
                             preferred_element_type=jnp.float32)
        # Gate order matches PyTorch: [i, f, g, o]; 128-lane-aligned slices.
        i_g = _sigmoid(gates[:, 0 * Hp:1 * Hp])
        f_g = _sigmoid(gates[:, 1 * Hp:2 * Hp])
        g_g = jnp.tanh(gates[:, 2 * Hp:3 * Hp])
        o_g = _sigmoid(gates[:, 3 * Hp:4 * Hp])
        c = f_g * c + i_g * g_g
        h = o_g * jnp.tanh(c)
        hs.append(h)

    hlast_ref[...] = h                                # (B, Hp), f32

    # Single fused dense projection over all timesteps.  Rows are time-major
    # (row = s*B + b); the wrapper does the tiny (S,B,:) -> (B,S,:) transpose.
    h_all = jnp.concatenate(hs, axis=0).astype(jnp.bfloat16)      # (S*B, Hp)
    out_ref[...] = (jnp.dot(h_all, wd, preferred_element_type=jnp.float32)
                    + bd_ref[...])


def _pad_gate_cols(w, H, Hp):
    """(..., 4H) -> (..., 4Hp): zero-pad each of the [i, f, g, o] gate blocks."""
    parts = []
    for g in range(4):
        blk = w[..., g * H:(g + 1) * H]
        pad = [(0, 0)] * (w.ndim - 1) + [(0, Hp - H)]
        parts.append(jnp.pad(blk, pad))
    return jnp.concatenate(parts, axis=-1)


def pad_params(params, *, n_features, hidden_dim, out_dim):
    """One-time layout prep: pad hidden / output dims to full 128-lane width."""
    assert hidden_dim <= HP, f"hidden_dim={hidden_dim} > {HP}: extend the padding scheme"
    assert out_dim <= OUT_PAD, f"out_dim={out_dim} > {OUT_PAD}: extend the padding scheme"
    H, Hp = hidden_dim, HP
    f_pad = -(-n_features // 8) * 8                   # sublane-align input weight rows
    w_ih_t = jnp.pad(_pad_gate_cols(params["w_ih_t"], H, Hp),
                     ((0, f_pad - n_features), (0, 0)))             # (F_pad, 4Hp)
    w_hh_t = jnp.pad(_pad_gate_cols(params["w_hh_t"], H, Hp),
                     ((0, Hp - H), (0, 0)))                         # (Hp, 4Hp)
    b = _pad_gate_cols(params["b"], H, Hp)                          # (1, 4Hp)
    w_d_t = jnp.pad(params["w_d_t"],
                    ((0, Hp - H), (0, OUT_PAD - out_dim)))          # (Hp, OUT_PAD)
    b_d = jnp.pad(params["b_d"], ((0, 0), (0, OUT_PAD - out_dim)))  # (1, OUT_PAD)
    return {"w_ih_t": w_ih_t, "w_hh_t": w_hh_t, "b": b,
            "w_d_t": w_d_t, "b_d": b_d}


def decoder_forward(Z, padded_params, *, seq_len, n_features, hidden_dim, out_dim):
    """Z: (B, 1, n_features) float32 — mirrors the intended Decoder usage."""
    B = Z.shape[0]
    x = Z[:, 0, :]                      # the timestep that gets repeated

    kernel = functools.partial(decoder_kernel, seq_len=seq_len,
                               n_features=n_features)
    vmem = pl.BlockSpec(memory_space=pltpu.MemorySpace.VMEM)

    # NOTE: no grid — total footprint is a few KB and the kernel is latency-
    # bound on the serial recurrence.  For production batch sizes, add a batch
    # grid axis with dimension_semantics=("parallel",) (constant index_map for
    # the weight inputs) so v7x's second TensorCore takes half the batch, and
    # size the batch block for v7x's 64 MiB VMEM.
    out_slab, h_last_p = pl.pallas_call(
        kernel,
        out_shape=(
            jax.ShapeDtypeStruct((seq_len * B, OUT_PAD), jnp.float32),
            jax.ShapeDtypeStruct((B, HP), jnp.float32),
        ),
        in_specs=[vmem] * 6,
        out_specs=(vmem, vmem),
    )(x, padded_params["w_ih_t"], padded_params["w_hh_t"], padded_params["b"],
      padded_params["w_d_t"], padded_params["b_d"])

    # Time-major rows (row = s*B + b): tiny reshape + transpose + slice in the
    # wrapper (negligible XLA ops at these sizes).
    out = out_slab.reshape(seq_len, B, OUT_PAD).transpose(1, 0, 2)[:, :, :out_dim]
    h_last = h_last_p[:, :hidden_dim]
    return out, h_last


def _reference_forward(Z, params, *, seq_len, hidden_dim, out_dim):
    """Pure-JAX f32 reference of the same semantics (for validation)."""
    H = hidden_dim
    x = Z[:, 0, :]
    xg = x @ params["w_ih_t"] + params["b"]
    B = x.shape[0]
    h = jnp.zeros((B, H), jnp.float32)
    c = jnp.zeros((B, H), jnp.float32)
    outs = []
    for _ in range(seq_len):
        gates = xg + h @ params["w_hh_t"]
        i_g = jax.nn.sigmoid(gates[:, 0 * H:1 * H])
        f_g = jax.nn.sigmoid(gates[:, 1 * H:2 * H])
        g_g = jnp.tanh(gates[:, 2 * H:3 * H])
        o_g = jax.nn.sigmoid(gates[:, 3 * H:4 * H])
        c = f_g * c + i_g * g_g
        h = o_g * jnp.tanh(c)
        outs.append(h @ params["w_d_t"] + params["b_d"])
    return jnp.stack(outs, axis=1), h


def init_params(key, n_features, hidden_dim, out_dim):
    """Deterministic init matching PyTorch shapes (uniform(-1/sqrt(H), 1/sqrt(H)))."""
    ks = jax.random.split(key, 6)
    k_lstm = 1.0 / jnp.sqrt(jnp.float32(hidden_dim))
    k_dense = 1.0 / jnp.sqrt(jnp.float32(hidden_dim))
    H4 = 4 * hidden_dim
    w_ih = jax.random.uniform(ks[0], (H4, n_features), jnp.float32, -k_lstm, k_lstm)
    w_hh = jax.random.uniform(ks[1], (H4, hidden_dim), jnp.float32, -k_lstm, k_lstm)
    b_ih = jax.random.uniform(ks[2], (H4,), jnp.float32, -k_lstm, k_lstm)
    b_hh = jax.random.uniform(ks[3], (H4,), jnp.float32, -k_lstm, k_lstm)
    w_d = jax.random.uniform(ks[4], (out_dim, hidden_dim), jnp.float32, -k_dense, k_dense)
    b_d = jax.random.uniform(ks[5], (out_dim,), jnp.float32, -k_dense, k_dense)
    return {
        "w_ih_t": w_ih.T,                       # (F, 4H)
        "w_hh_t": w_hh.T,                       # (H, 4H)
        "b": (b_ih + b_hh)[None, :],            # (1, 4H)
        "w_d_t": w_d.T,                         # (H, out_dim)
        "b_d": b_d[None, :],                    # (1, out_dim)
    }


if __name__ == "__main__":
    # Shapes consistent with Decoder(n_features=4, seq_len=8, hidden_dim=32, out_dim=28)
    B, n_features, seq_len, hidden_dim, out_dim = 2, 4, 8, 32, 28

    key = jax.random.PRNGKey(0)
    k_z, k_p = jax.random.split(key)
    Z = jax.random.normal(k_z, (B, 1, n_features), jnp.float32)
    params = init_params(k_p, n_features, hidden_dim, out_dim)
    padded = pad_params(params, n_features=n_features,
                        hidden_dim=hidden_dim, out_dim=out_dim)

    out, h_last = decoder_forward(Z, padded, seq_len=seq_len,
                                  n_features=n_features,
                                  hidden_dim=hidden_dim, out_dim=out_dim)
    out = jax.block_until_ready(out)
    h_last = jax.block_until_ready(h_last)

    assert out.shape == (B, seq_len, out_dim)
    assert h_last.shape == (B, hidden_dim)

    ref_out, ref_h = _reference_forward(Z, params, seq_len=seq_len,
                                        hidden_dim=hidden_dim, out_dim=out_dim)
    # Tolerance is set for bf16 MXU operands (f32 accumulation): the recurrence
    # and dense matmuls use bf16 inputs, which puts the kernel-vs-f32-reference
    # error in the low 1e-3..1e-2 band after 8 compounding steps.
    assert jnp.allclose(out, ref_out, atol=2e-2, rtol=2e-2)
    assert jnp.allclose(h_last, ref_h, atol=2e-2, rtol=2e-2)

    print("KERNEL_OK")
</pallas_src>

<mosaic_0001>
module attributes {stable_mosaic.version = 11 : i64} {
  func.func @decoder_kernel(%arg0: memref<2x4xf32, #tpu.memory_space<vmem>>, %arg1: memref<8x512xf32, #tpu.memory_space<vmem>>, %arg2: memref<128x512xf32, #tpu.memory_space<vmem>>, %arg3: memref<1x512xf32, #tpu.memory_space<vmem>>, %arg4: memref<128x128xf32, #tpu.memory_space<vmem>>, %arg5: memref<1x128xf32, #tpu.memory_space<vmem>>, %arg6: memref<16x128xf32, #tpu.memory_space<vmem>>, %arg7: memref<2x128xf32, #tpu.memory_space<vmem>>) attributes {dimension_semantics = [], scalar_prefetch = 0 : i64, scratch_operands = 0 : i64, tpu.core_type = #tpu.core_type<tc>} {
    %c0 = arith.constant 0 : index
    %c0_0 = arith.constant 0 : index
    %0 = vector.load %arg2[%c0, %c0_0] : memref<128x512xf32, #tpu.memory_space<vmem>>, vector<128x512xf32>
    %1 = arith.truncf %0 : vector<128x512xf32> to vector<128x512xbf16>
    %c0_1 = arith.constant 0 : index
    %c0_2 = arith.constant 0 : index
    %2 = vector.load %arg4[%c0_1, %c0_2] : memref<128x128xf32, #tpu.memory_space<vmem>>, vector<128x128xf32>
    %3 = arith.truncf %2 : vector<128x128xf32> to vector<128x128xbf16>
    %c0_3 = arith.constant 0 : index
    %c0_4 = arith.constant 0 : index
    %4 = vector.load %arg0[%c0_3, %c0_4] : memref<2x4xf32, #tpu.memory_space<vmem>>, vector<2x4xf32>
    %c0_5 = arith.constant 0 : index
    %c0_6 = arith.constant 0 : index
    %5 = vector.load %arg1[%c0_5, %c0_6] : memref<8x512xf32, #tpu.memory_space<vmem>>, vector<8x512xf32>
    %c0_7 = arith.constant 0 : index
    %c0_8 = arith.constant 0 : index
    %6 = vector.load %arg3[%c0_7, %c0_8] : memref<1x512xf32, #tpu.memory_space<vmem>>, vector<1x512xf32>
    %7 = vector.shape_cast %6 : vector<1x512xf32> to vector<1x512xf32>
    %8 = vector.broadcast %7 : vector<1x512xf32> to vector<2x512xf32>
    %9 = vector.extract_strided_slice %4 {offsets = [0, 0], sizes = [2, 1], strides = [1, 1]} : vector<2x4xf32> to vector<2x1xf32>
    %10 = vector.extract_strided_slice %5 {offsets = [0, 0], sizes = [1, 512], strides = [1, 1]} : vector<8x512xf32> to vector<1x512xf32>
    %11 = vector.broadcast %9 : vector<2x1xf32> to vector<2x512xf32>
    %12 = vector.broadcast %10 : vector<1x512xf32> to vector<2x512xf32>
    %13 = arith.mulf %11, %12 : vector<2x512xf32>
    %14 = arith.addf %8, %13 : vector<2x512xf32>
    %15 = vector.extract_strided_slice %4 {offsets = [0, 1], sizes = [2, 1], strides = [1, 1]} : vector<2x4xf32> to vector<2x1xf32>
    %16 = vector.extract_strided_slice %5 {offsets = [1, 0], sizes = [1, 512], strides = [1, 1]} : vector<8x512xf32> to vector<1x512xf32>
    %17 = vector.broadcast %15 : vector<2x1xf32> to vector<2x512xf32>
    %18 = vector.broadcast %16 : vector<1x512xf32> to vector<2x512xf32>
    %19 = arith.mulf %17, %18 : vector<2x512xf32>
    %20 = arith.addf %14, %19 : vector<2x512xf32>
    %21 = vector.extract_strided_slice %4 {offsets = [0, 2], sizes = [2, 1], strides = [1, 1]} : vector<2x4xf32> to vector<2x1xf32>
    %22 = vector.extract_strided_slice %5 {offsets = [2, 0], sizes = [1, 512], strides = [1, 1]} : vector<8x512xf32> to vector<1x512xf32>
    %23 = vector.broadcast %21 : vector<2x1xf32> to vector<2x512xf32>
    %24 = vector.broadcast %22 : vector<1x512xf32> to vector<2x512xf32>
    %25 = arith.mulf %23, %24 : vector<2x512xf32>
    %26 = arith.addf %20, %25 : vector<2x512xf32>
    %27 = vector.extract_strided_slice %4 {offsets = [0, 3], sizes = [2, 1], strides = [1, 1]} : vector<2x4xf32> to vector<2x1xf32>
    %28 = vector.extract_strided_slice %5 {offsets = [3, 0], sizes = [1, 512], strides = [1, 1]} : vector<8x512xf32> to vector<1x512xf32>
    %29 = vector.broadcast %27 : vector<2x1xf32> to vector<2x512xf32>
    %30 = vector.broadcast %28 : vector<1x512xf32> to vector<2x512xf32>
    %31 = arith.mulf %29, %30 : vector<2x512xf32>
    %32 = arith.addf %26, %31 : vector<2x512xf32>
    %33 = vector.extract_strided_slice %32 {offsets = [0, 0], sizes = [2, 128], strides = [1, 1]} : vector<2x512xf32> to vector<2x128xf32>
    %cst = arith.constant 5.000000e-01 : f32
    %34 = vector.broadcast %cst : f32 to vector<2x128xf32>
    %35 = arith.mulf %34, %33 : vector<2x128xf32>
    %36 = math.tanh %35 : vector<2x128xf32>
    %cst_9 = arith.constant 5.000000e-01 : f32
    %37 = vector.broadcast %cst_9 : f32 to vector<2x128xf32>
    %38 = arith.mulf %37, %36 : vector<2x128xf32>
    %cst_10 = arith.constant 5.000000e-01 : f32
    %39 = vector.broadcast %cst_10 : f32 to vector<2x128xf32>
    %40 = arith.addf %38, %39 : vector<2x128xf32>
    %41 = vector.extract_strided_slice %32 {offsets = [0, 256], sizes = [2, 128], strides = [1, 1]} : vector<2x512xf32> to vector<2x128xf32>
    %42 = math.tanh %41 : vector<2x128xf32>
    %43 = vector.extract_strided_slice %32 {offsets = [0, 384], sizes = [2, 128], strides = [1, 1]} : vector<2x512xf32> to vector<2x128xf32>
    %cst_11 = arith.constant 5.000000e-01 : f32
    %44 = vector.broadcast %cst_11 : f32 to vector<2x128xf32>
    %45 = arith.mulf %44, %43 : vector<2x128xf32>
    %46 = math.tanh %45 : vector<2x128xf32>
    %cst_12 = arith.constant 5.000000e-01 : f32
    %47 = vector.broadcast %cst_12 : f32 to vector<2x128xf32>
    %48 = arith.mulf %47, %46 : vector<2x128xf32>
    %cst_13 = arith.constant 5.000000e-01 : f32
    %49 = vector.broadcast %cst_13 : f32 to vector<2x128xf32>
    %50 = arith.addf %48, %49 : vector<2x128xf32>
    %51 = arith.mulf %40, %42 : vector<2x128xf32>
    %52 = math.tanh %51 : vector<2x128xf32>
    %53 = arith.mulf %50, %52 : vector<2x128xf32>
    %54 = arith.truncf %53 : vector<2x128xf32> to vector<2x128xbf16>
    %cst_14 = arith.constant dense<0.000000e+00> : vector<2x512xf32>
    %55 = tpu.matmul %54, %1, %cst_14 {dimension_numbers = #tpu.dot_dimension_numbers<[1], [0], [0], [1], [0, 0, 1, 1], [], []>} : vector<2x128xbf16>, vector<128x512xbf16>, vector<2x512xf32> -> vector<2x512xf32>
    %56 = arith.addf %32, %55 : vector<2x512xf32>
    %57 = vector.extract_strided_slice %56 {offsets = [0, 0], sizes = [2, 128], strides = [1, 1]} : vector<2x512xf32> to vector<2x128xf32>
    %cst_15 = arith.constant 5.000000e-01 : f32
    %58 = vector.broadcast %cst_15 : f32 to vector<2x128xf32>
    %59 = arith.mulf %58, %57 : vector<2x128xf32>
    %60 = math.tanh %59 : vector<2x128xf32>
    %cst_16 = arith.constant 5.000000e-01 : f32
    %61 = vector.broadcast %cst_16 : f32 to vector<2x128xf32>
    %62 = arith.mulf %61, %60 : vector<2x128xf32>
    %cst_17 = arith.constant 5.000000e-01 : f32
    %63 = vector.broadcast %cst_17 : f32 to vector<2x128xf32>
    %64 = arith.addf %62, %63 : vector<2x128xf32>
    %65 = vector.extract_strided_slice %56 {offsets = [0, 128], sizes = [2, 128], strides = [1, 1]} : vector<2x512xf32> to vector<2x128xf32>
    %cst_18 = arith.constant 5.000000e-01 : f32
    %66 = vector.broadcast %cst_18 : f32 to vector<2x128xf32>
    %67 = arith.mulf %66, %65 : vector<2x128xf32>
    %68 = math.tanh %67 : vector<2x128xf32>
    %cst_19 = arith.constant 5.000000e-01 : f32
    %69 = vector.broadcast %cst_19 : f32 to vector<2x128xf32>
    %70 = arith.mulf %69, %68 : vector<2x128xf32>
    %cst_20 = arith.constant 5.000000e-01 : f32
    %71 = vector.broadcast %cst_20 : f32 to vector<2x128xf32>
    %72 = arith.addf %70, %71 : vector<2x128xf32>
    %73 = vector.extract_strided_slice %56 {offsets = [0, 256], sizes = [2, 128], strides = [1, 1]} : vector<2x512xf32> to vector<2x128xf32>
    %74 = math.tanh %73 : vector<2x128xf32>
    %75 = vector.extract_strided_slice %56 {offsets = [0, 384], sizes = [2, 128], strides = [1, 1]} : vector<2x512xf32> to vector<2x128xf32>
    %cst_21 = arith.constant 5.000000e-01 : f32
    %76 = vector.broadcast %cst_21 : f32 to vector<2x128xf32>
    %77 = arith.mulf %76, %75 : vector<2x128xf32>
    %78 = math.tanh %77 : vector<2x128xf32>
    %cst_22 = arith.constant 5.000000e-01 : f32
    %79 = vector.broadcast %cst_22 : f32 to vector<2x128xf32>
    %80 = arith.mulf %79, %78 : vector<2x128xf32>
    %cst_23 = arith.constant 5.000000e-01 : f32
    %81 = vector.broadcast %cst_23 : f32 to vector<2x128xf32>
    %82 = arith.addf %80, %81 : vector<2x128xf32>
    %83 = arith.mulf %72, %51 : vector<2x128xf32>
    %84 = arith.mulf %64, %74 : vector<2x128xf32>
    %85 = arith.addf %83, %84 : vector<2x128xf32>
    %86 = math.tanh %85 : vector<2x128xf32>
    %87 = arith.mulf %82, %86 : vector<2x128xf32>
    %88 = arith.truncf %87 : vector<2x128xf32> to vector<2x128xbf16>
    %cst_24 = arith.constant dense<0.000000e+00> : vector<2x512xf32>
    %89 = tpu.matmul %88, %1, %cst_24 {dimension_numbers = #tpu.dot_dimension_numbers<[1], [0], [0], [1], [0, 0, 1, 1], [], []>} : vector<2x128xbf16>, vector<128x512xbf16>, vector<2x512xf32> -> vector<2x512xf32>
    %90 = arith.addf %32, %89 : vector<2x512xf32>
    %91 = vector.extract_strided_slice %90 {offsets = [0, 0], sizes = [2, 128], strides = [1, 1]} : vector<2x512xf32> to vector<2x128xf32>
    %cst_25 = arith.constant 5.000000e-01 : f32
    %92 = vector.broadcast %cst_25 : f32 to vector<2x128xf32>
    %93 = arith.mulf %92, %91 : vector<2x128xf32>
    %94 = math.tanh %93 : vector<2x128xf32>
    %cst_26 = arith.constant 5.000000e-01 : f32
    %95 = vector.broadcast %cst_26 : f32 to vector<2x128xf32>
    %96 = arith.mulf %95, %94 : vector<2x128xf32>
    %cst_27 = arith.constant 5.000000e-01 : f32
    %97 = vector.broadcast %cst_27 : f32 to vector<2x128xf32>
    %98 = arith.addf %96, %97 : vector<2x128xf32>
    %99 = vector.extract_strided_slice %90 {offsets = [0, 128], sizes = [2, 128], strides = [1, 1]} : vector<2x512xf32> to vector<2x128xf32>
    %cst_28 = arith.constant 5.000000e-01 : f32
    %100 = vector.broadcast %cst_28 : f32 to vector<2x128xf32>
    %101 = arith.mulf %100, %99 : vector<2x128xf32>
    %102 = math.tanh %101 : vector<2x128xf32>
    %cst_29 = arith.constant 5.000000e-01 : f32
    %103 = vector.broadcast %cst_29 : f32 to vector<2x128xf32>
    %104 = arith.mulf %103, %102 : vector<2x128xf32>
    %cst_30 = arith.constant 5.000000e-01 : f32
    %105 = vector.broadcast %cst_30 : f32 to vector<2x128xf32>
    %106 = arith.addf %104, %105 : vector<2x128xf32>
    %107 = vector.extract_strided_slice %90 {offsets = [0, 256], sizes = [2, 128], strides = [1, 1]} : vector<2x512xf32> to vector<2x128xf32>
    %108 = math.tanh %107 : vector<2x128xf32>
    %109 = vector.extract_strided_slice %90 {offsets = [0, 384], sizes = [2, 128], strides = [1, 1]} : vector<2x512xf32> to vector<2x128xf32>
    %cst_31 = arith.constant 5.000000e-01 : f32
    %110 = vector.broadcast %cst_31 : f32 to vector<2x128xf32>
    %111 = arith.mulf %110, %109 : vector<2x128xf32>
    %112 = math.tanh %111 : vector<2x128xf32>
    %cst_32 = arith.constant 5.000000e-01 : f32
    %113 = vector.broadcast %cst_32 : f32 to vector<2x128xf32>
    %114 = arith.mulf %113, %112 : vector<2x128xf32>
    %cst_33 = arith.constant 5.000000e-01 : f32
    %115 = vector.broadcast %cst_33 : f32 to vector<2x128xf32>
    %116 = arith.addf %114, %115 : vector<2x128xf32>
    %117 = arith.mulf %106, %85 : vector<2x128xf32>
    %118 = arith.mulf %98, %108 : vector<2x128xf32>
    %119 = arith.addf %117, %118 : vector<2x128xf32>
    %120 = math.tanh %119 : vector<2x128xf32>
    %121 = arith.mulf %116, %120 : vector<2x128xf32>
    %122 = arith.truncf %121 : vector<2x128xf32> to vector<2x128xbf16>
    %cst_34 = arith.constant dense<0.000000e+00> : vector<2x512xf32>
    %123 = tpu.matmul %122, %1, %cst_34 {dimension_numbers = #tpu.dot_dimension_numbers<[1], [0], [0], [1], [0, 0, 1, 1], [], []>} : vector<2x128xbf16>, vector<128x512xbf16>, vector<2x512xf32> -> vector<2x512xf32>
    %124 = arith.addf %32, %123 : vector<2x512xf32>
    %125 = vector.extract_strided_slice %124 {offsets = [0, 0], sizes = [2, 128], strides = [1, 1]} : vector<2x512xf32> to vector<2x128xf32>
    %cst_35 = arith.constant 5.000000e-01 : f32
    %126 = vector.broadcast %cst_35 : f32 to vector<2x128xf32>
    %127 = arith.mulf %126, %125 : vector<2x128xf32>
    %128 = math.tanh %127 : vector<2x128xf32>
    %cst_36 = arith.constant 5.000000e-01 : f32
    %129 = vector.broadcast %cst_36 : f32 to vector<2x128xf32>
    %130 = arith.mulf %129, %128 : vector<2x128xf32>
    %cst_37 = arith.constant 5.000000e-01 : f32
    %131 = vector.broadcast %cst_37 : f32 to vector<2x128xf32>
    %132 = arith.addf %130, %131 : vector<2x128xf32>
    %133 = vector.extract_strided_slice %124 {offsets = [0, 128], sizes = [2, 128], strides = [1, 1]} : vector<2x512xf32> to vector<2x128xf32>
    %cst_38 = arith.constant 5.000000e-01 : f32
    %134 = vector.broadcast %cst_38 : f32 to vector<2x128xf32>
    %135 = arith.mulf %134, %133 : vector<2x128xf32>
    %136 = math.tanh %135 : vector<2x128xf32>
    %cst_39 = arith.constant 5.000000e-01 : f32
    %137 = vector.broadcast %cst_39 : f32 to vector<2x128xf32>
    %138 = arith.mulf %137, %136 : vector<2x128xf32>
    %cst_40 = arith.constant 5.000000e-01 : f32
    %139 = vector.broadcast %cst_40 : f32 to vector<2x128xf32>
    %140 = arith.addf %138, %139 : vector<2x128xf32>
    %141 = vector.extract_strided_slice %124 {offsets = [0, 256], sizes = [2, 128], strides = [1, 1]} : vector<2x512xf32> to vector<2x128xf32>
    %142 = math.tanh %141 : vector<2x128xf32>
    %143 = vector.extract_strided_slice %124 {offsets = [0, 384], sizes = [2, 128], strides = [1, 1]} : vector<2x512xf32> to vector<2x128xf32>
    %cst_41 = arith.constant 5.000000e-01 : f32
    %144 = vector.broadcast %cst_41 : f32 to vector<2x128xf32>
    %145 = arith.mulf %144, %143 : vector<2x128xf32>
    %146 = math.tanh %145 : vector<2x128xf32>
    %cst_42 = arith.constant 5.000000e-01 : f32
    %147 = vector.broadcast %cst_42 : f32 to vector<2x128xf32>
    %148 = arith.mulf %147, %146 : vector<2x128xf32>
    %cst_43 = arith.constant 5.000000e-01 : f32
    %149 = vector.broadcast %cst_43 : f32 to vector<2x128xf32>
    %150 = arith.addf %148, %149 : vector<2x128xf32>
    %151 = arith.mulf %140, %119 : vector<2x128xf32>
    %152 = arith.mulf %132, %142 : vector<2x128xf32>
    %153 = arith.addf %151, %152 : vector<2x128xf32>
    %154 = math.tanh %153 : vector<2x128xf32>
    %155 = arith.mulf %150, %154 : vector<2x128xf32>
    %156 = arith.truncf %155 : vector<2x128xf32> to vector<2x128xbf16>
    %cst_44 = arith.constant dense<0.000000e+00> : vector<2x512xf32>
    %157 = tpu.matmul %156, %1, %cst_44 {dimension_numbers = #tpu.dot_dimension_numbers<[1], [0], [0], [1], [0, 0, 1, 1], [], []>} : vector<2x128xbf16>, vector<128x512xbf16>, vector<2x512xf32> -> vector<2x512xf32>
    %158 = arith.addf %32, %157 : vector<2x512xf32>
    %159 = vector.extract_strided_slice %158 {offsets = [0, 0], sizes = [2, 128], strides = [1, 1]} : vector<2x512xf32> to vector<2x128xf32>
    %cst_45 = arith.constant 5.000000e-01 : f32
    %160 = vector.broadcast %cst_45 : f32 to vector<2x128xf32>
    %161 = arith.mulf %160, %159 : vector<2x128xf32>
    %162 = math.tanh %161 : vector<2x128xf32>
    %cst_46 = arith.constant 5.000000e-01 : f32
    %163 = vector.broadcast %cst_46 : f32 to vector<2x128xf32>
    %164 = arith.mulf %163, %162 : vector<2x128xf32>
    %cst_47 = arith.constant 5.000000e-01 : f32
    %165 = vector.broadcast %cst_47 : f32 to vector<2x128xf32>
    %166 = arith.addf %164, %165 : vector<2x128xf32>
    %167 = vector.extract_strided_slice %158 {offsets = [0, 128], sizes = [2, 128], strides = [1, 1]} : vector<2x512xf32> to vector<2x128xf32>
    %cst_48 = arith.constant 5.000000e-01 : f32
    %168 = vector.broadcast %cst_48 : f32 to vector<2x128xf32>
    %169 = arith.mulf %168, %167 : vector<2x128xf32>
    %170 = math.tanh %169 : vector<2x128xf32>
    %cst_49 = arith.constant 5.000000e-01 : f32
    %171 = vector.broadcast %cst_49 : f32 to vector<2x128xf32>
    %172 = arith.mulf %171, %170 : vector<2x128xf32>
    %cst_50 = arith.constant 5.000000e-01 : f32
    %173 = vector.broadcast %cst_50 : f32 to vector<2x128xf32>
    %174 = arith.addf %172, %173 : vector<2x128xf32>
    %175 = vector.extract_strided_slice %158 {offsets = [0, 256], sizes = [2, 128], strides = [1, 1]} : vector<2x512xf32> to vector<2x128xf32>
    %176 = math.tanh %175 : vector<2x128xf32>
    %177 = vector.extract_strided_slice %158 {offsets = [0, 384], sizes = [2, 128], strides = [1, 1]} : vector<2x512xf32> to vector<2x128xf32>
    %cst_51 = arith.constant 5.000000e-01 : f32
    %178 = vector.broadcast %cst_51 : f32 to vector<2x128xf32>
    %179 = arith.mulf %178, %177 : vector<2x128xf32>
    %180 = math.tanh %179 : vector<2x128xf32>
    %cst_52 = arith.constant 5.000000e-01 : f32
    %181 = vector.broadcast %cst_52 : f32 to vector<2x128xf32>
    %182 = arith.mulf %181, %180 : vector<2x128xf32>
    %cst_53 = arith.constant 5.000000e-01 : f32
    %183 = vector.broadcast %cst_53 : f32 to vector<2x128xf32>
    %184 = arith.addf %182, %183 : vector<2x128xf32>
    %185 = arith.mulf %174, %153 : vector<2x128xf32>
    %186 = arith.mulf %166, %176 : vector<2x128xf32>
    %187 = arith.addf %185, %186 : vector<2x128xf32>
    %188 = math.tanh %187 : vector<2x128xf32>
    %189 = arith.mulf %184, %188 : vector<2x128xf32>
    %190 = arith.truncf %189 : vector<2x128xf32> to vector<2x128xbf16>
    %cst_54 = arith.constant dense<0.000000e+00> : vector<2x512xf32>
    %191 = tpu.matmul %190, %1, %cst_54 {dimension_numbers = #tpu.dot_dimension_numbers<[1], [0], [0], [1], [0, 0, 1, 1], [], []>} : vector<2x128xbf16>, vector<128x512xbf16>, vector<2x512xf32> -> vector<2x512xf32>
    %192 = arith.addf %32, %191 : vector<2x512xf32>
    %193 = vector.extract_strided_slice %192 {offsets = [0, 0], sizes = [2, 128], strides = [1, 1]} : vector<2x512xf32> to vector<2x128xf32>
    %cst_55 = arith.constant 5.000000e-01 : f32
    %194 = vector.broadcast %cst_55 : f32 to vector<2x128xf32>
    %195 = arith.mulf %194, %193 : vector<2x128xf32>
    %196 = math.tanh %195 : vector<2x128xf32>
    %cst_56 = arith.constant 5.000000e-01 : f32
    %197 = vector.broadcast %cst_56 : f32 to vector<2x128xf32>
    %198 = arith.mulf %197, %196 : vector<2x128xf32>
    %cst_57 = arith.constant 5.000000e-01 : f32
    %199 = vector.broadcast %cst_57 : f32 to vector<2x128xf32>
    %200 = arith.addf %198, %199 : vector<2x128xf32>
    %201 = vector.extract_strided_slice %192 {offsets = [0, 128], sizes = [2, 128], strides = [1, 1]} : vector<2x512xf32> to vector<2x128xf32>
    %cst_58 = arith.constant 5.000000e-01 : f32
    %202 = vector.broadcast %cst_58 : f32 to vector<2x128xf32>
    %203 = arith.mulf %202, %201 : vector<2x128xf32>
    %204 = math.tanh %203 : vector<2x128xf32>
    %cst_59 = arith.constant 5.000000e-01 : f32
    %205 = vector.broadcast %cst_59 : f32 to vector<2x128xf32>
    %206 = arith.mulf %205, %204 : vector<2x128xf32>
    %cst_60 = arith.constant 5.000000e-01 : f32
    %207 = vector.broadcast %cst_60 : f32 to vector<2x128xf32>
    %208 = arith.addf %206, %207 : vector<2x128xf32>
    %209 = vector.extract_strided_slice %192 {offsets = [0, 256], sizes = [2, 128], strides = [1, 1]} : vector<2x512xf32> to vector<2x128xf32>
    %210 = math.tanh %209 : vector<2x128xf32>
    %211 = vector.extract_strided_slice %192 {offsets = [0, 384], sizes = [2, 128], strides = [1, 1]} : vector<2x512xf32> to vector<2x128xf32>
    %cst_61 = arith.constant 5.000000e-01 : f32
    %212 = vector.broadcast %cst_61 : f32 to vector<2x128xf32>
    %213 = arith.mulf %212, %211 : vector<2x128xf32>
    %214 = math.tanh %213 : vector<2x128xf32>
    %cst_62 = arith.constant 5.000000e-01 : f32
    %215 = vector.broadcast %cst_62 : f32 to vector<2x128xf32>
    %216 = arith.mulf %215, %214 : vector<2x128xf32>
    %cst_63 = arith.constant 5.000000e-01 : f32
    %217 = vector.broadcast %cst_63 : f32 to vector<2x128xf32>
    %218 = arith.addf %216, %217 : vector<2x128xf32>
    %219 = arith.mulf %208, %187 : vector<2x128xf32>
    %220 = arith.mulf %200, %210 : vector<2x128xf32>
    %221 = arith.addf %219, %220 : vector<2x128xf32>
    %222 = math.tanh %221 : vector<2x128xf32>
    %223 = arith.mulf %218, %222 : vector<2x128xf32>
    %224 = arith.truncf %223 : vector<2x128xf32> to vector<2x128xbf16>
    %cst_64 = arith.constant dense<0.000000e+00> : vector<2x512xf32>
    %225 = tpu.matmul %224, %1, %cst_64 {dimension_numbers = #tpu.dot_dimension_numbers<[1], [0], [0], [1], [0, 0, 1, 1], [], []>} : vector<2x128xbf16>, vector<128x512xbf16>, vector<2x512xf32> -> vector<2x512xf32>
    %226 = arith.addf %32, %225 : vector<2x512xf32>
    %227 = vector.extract_strided_slice %226 {offsets = [0, 0], sizes = [2, 128], strides = [1, 1]} : vector<2x512xf32> to vector<2x128xf32>
    %cst_65 = arith.constant 5.000000e-01 : f32
    %228 = vector.broadcast %cst_65 : f32 to vector<2x128xf32>
    %229 = arith.mulf %228, %227 : vector<2x128xf32>
    %230 = math.tanh %229 : vector<2x128xf32>
    %cst_66 = arith.constant 5.000000e-01 : f32
    %231 = vector.broadcast %cst_66 : f32 to vector<2x128xf32>
    %232 = arith.mulf %231, %230 : vector<2x128xf32>
    %cst_67 = arith.constant 5.000000e-01 : f32
    %233 = vector.broadcast %cst_67 : f32 to vector<2x128xf32>
    %234 = arith.addf %232, %233 : vector<2x128xf32>
    %235 = vector.extract_strided_slice %226 {offsets = [0, 128], sizes = [2, 128], strides = [1, 1]} : vector<2x512xf32> to vector<2x128xf32>
    %cst_68 = arith.constant 5.000000e-01 : f32
    %236 = vector.broadcast %cst_68 : f32 to vector<2x128xf32>
    %237 = arith.mulf %236, %235 : vector<2x128xf32>
    %238 = math.tanh %237 : vector<2x128xf32>
    %cst_69 = arith.constant 5.000000e-01 : f32
    %239 = vector.broadcast %cst_69 : f32 to vector<2x128xf32>
    %240 = arith.mulf %239, %238 : vector<2x128xf32>
    %cst_70 = arith.constant 5.000000e-01 : f32
    %241 = vector.broadcast %cst_70 : f32 to vector<2x128xf32>
    %242 = arith.addf %240, %241 : vector<2x128xf32>
    %243 = vector.extract_strided_slice %226 {offsets = [0, 256], sizes = [2, 128], strides = [1, 1]} : vector<2x512xf32> to vector<2x128xf32>
    %244 = math.tanh %243 : vector<2x128xf32>
    %245 = vector.extract_strided_slice %226 {offsets = [0, 384], sizes = [2, 128], strides = [1, 1]} : vector<2x512xf32> to vector<2x128xf32>
    %cst_71 = arith.constant 5.000000e-01 : f32
    %246 = vector.broadcast %cst_71 : f32 to vector<2x128xf32>
    %247 = arith.mulf %246, %245 : vector<2x128xf32>
    %248 = math.tanh %247 : vector<2x128xf32>
    %cst_72 = arith.constant 5.000000e-01 : f32
    %249 = vector.broadcast %cst_72 : f32 to vector<2x128xf32>
    %250 = arith.mulf %249, %248 : vector<2x128xf32>
    %cst_73 = arith.constant 5.000000e-01 : f32
    %251 = vector.broadcast %cst_73 : f32 to vector<2x128xf32>
    %252 = arith.addf %250, %251 : vector<2x128xf32>
    %253 = arith.mulf %242, %221 : vector<2x128xf32>
    %254 = arith.mulf %234, %244 : vector<2x128xf32>
    %255 = arith.addf %253, %254 : vector<2x128xf32>
    %256 = math.tanh %255 : vector<2x128xf32>
    %257 = arith.mulf %252, %256 : vector<2x128xf32>
    %258 = arith.truncf %257 : vector<2x128xf32> to vector<2x128xbf16>
    %cst_74 = arith.constant dense<0.000000e+00> : vector<2x512xf32>
    %259 = tpu.matmul %258, %1, %cst_74 {dimension_numbers = #tpu.dot_dimension_numbers<[1], [0], [0], [1], [0, 0, 1, 1], [], []>} : vector<2x128xbf16>, vector<128x512xbf16>, vector<2x512xf32> -> vector<2x512xf32>
    %260 = arith.addf %32, %259 : vector<2x512xf32>
    %261 = vector.extract_strided_slice %260 {offsets = [0, 0], sizes = [2, 128], strides = [1, 1]} : vector<2x512xf32> to vector<2x128xf32>
    %cst_75 = arith.constant 5.000000e-01 : f32
    %262 = vector.broadcast %cst_75 : f32 to vector<2x128xf32>
    %263 = arith.mulf %262, %261 : vector<2x128xf32>
    %264 = math.tanh %263 : vector<2x128xf32>
    %cst_76 = arith.constant 5.000000e-01 : f32
    %265 = vector.broadcast %cst_76 : f32 to vector<2x128xf32>
    %266 = arith.mulf %265, %264 : vector<2x128xf32>
    %cst_77 = arith.constant 5.000000e-01 : f32
    %267 = vector.broadcast %cst_77 : f32 to vector<2x128xf32>
    %268 = arith.addf %266, %267 : vector<2x128xf32>
    %269 = vector.extract_strided_slice %260 {offsets = [0, 128], sizes = [2, 128], strides = [1, 1]} : vector<2x512xf32> to vector<2x128xf32>
    %cst_78 = arith.constant 5.000000e-01 : f32
    %270 = vector.broadcast %cst_78 : f32 to vector<2x128xf32>
    %271 = arith.mulf %270, %269 : vector<2x128xf32>
    %272 = math.tanh %271 : vector<2x128xf32>
    %cst_79 = arith.constant 5.000000e-01 : f32
    %273 = vector.broadcast %cst_79 : f32 to vector<2x128xf32>
    %274 = arith.mulf %273, %272 : vector<2x128xf32>
    %cst_80 = arith.constant 5.000000e-01 : f32
    %275 = vector.broadcast %cst_80 : f32 to vector<2x128xf32>
    %276 = arith.addf %274, %275 : vector<2x128xf32>
    %277 = vector.extract_strided_slice %260 {offsets = [0, 256], sizes = [2, 128], strides = [1, 1]} : vector<2x512xf32> to vector<2x128xf32>
    %278 = math.tanh %277 : vector<2x128xf32>
    %279 = vector.extract_strided_slice %260 {offsets = [0, 384], sizes = [2, 128], strides = [1, 1]} : vector<2x512xf32> to vector<2x128xf32>
    %cst_81 = arith.constant 5.000000e-01 : f32
    %280 = vector.broadcast %cst_81 : f32 to vector<2x128xf32>
    %281 = arith.mulf %280, %279 : vector<2x128xf32>
    %282 = math.tanh %281 : vector<2x128xf32>
    %cst_82 = arith.constant 5.000000e-01 : f32
    %283 = vector.broadcast %cst_82 : f32 to vector<2x128xf32>
    %284 = arith.mulf %283, %282 : vector<2x128xf32>
    %cst_83 = arith.constant 5.000000e-01 : f32
    %285 = vector.broadcast %cst_83 : f32 to vector<2x128xf32>
    %286 = arith.addf %284, %285 : vector<2x128xf32>
    %287 = arith.mulf %276, %255 : vector<2x128xf32>
    %288 = arith.mulf %268, %278 : vector<2x128xf32>
    %289 = arith.addf %287, %288 : vector<2x128xf32>
    %290 = math.tanh %289 : vector<2x128xf32>
    %291 = arith.mulf %286, %290 : vector<2x128xf32>
    %c0_84 = arith.constant 0 : index
    %c0_85 = arith.constant 0 : index
    %292 = vector.load %arg7[%c0_84, %c0_85] : memref<2x128xf32, #tpu.memory_space<vmem>>, vector<2x128xf32>
    tpu.vector_store %arg7[%c0_84, %c0_85], %291 {strides = array<i32>} : memref<2x128xf32, #tpu.memory_space<vmem>>, vector<2x128xf32>,
    %293 = tpu.concatenate %53, %87, %121, %155, %189, %223, %257, %291 in 0 : vector<2x128xf32>, vector<2x128xf32>, vector<2x128xf32>, vector<2x128xf32>, vector<2x128xf32>, vector<2x128xf32>, vector<2x128xf32>, vector<2x128xf32> -> vector<16x128xf32>
    %294 = arith.truncf %293 : vector<16x128xf32> to vector<16x128xbf16>
    %cst_86 = arith.constant dense<0.000000e+00> : vector<16x128xf32>
    %295 = tpu.matmul %294, %3, %cst_86 {dimension_numbers = #tpu.dot_dimension_numbers<[1], [0], [0], [1], [0, 0, 1, 1], [], []>} : vector<16x128xbf16>, vector<128x128xbf16>, vector<16x128xf32> -> vector<16x128xf32>
    %c0_87 = arith.constant 0 : index
    %c0_88 = arith.constant 0 : index
    %296 = vector.load %arg5[%c0_87, %c0_88] : memref<1x128xf32, #tpu.memory_space<vmem>>, vector<1x128xf32>
    %297 = vector.broadcast %296 : vector<1x128xf32> to vector<16x128xf32>
    %298 = arith.addf %295, %297 : vector<16x128xf32>
    %c0_89 = arith.constant 0 : index
    %c0_90 = arith.constant 0 : index
    %299 = vector.load %arg6[%c0_89, %c0_90] : memref<16x128xf32, #tpu.memory_space<vmem>>, vector<16x128xf32>
    tpu.vector_store %arg6[%c0_89, %c0_90], %298 {strides = array<i32>} : memref<16x128xf32, #tpu.memory_space<vmem>>, vector<16x128xf32>,
    return
  }
}

</mosaic_0001>

<llo_original>
// kernel: tpu_custom_call.1
$region0: #{tpu_custom_call.1}
  #allocation0 [shape = 'u32[]', space=smem, size = 0x4, offset = 0x4, fixed_abs, tag = 'smem constant byte address 0x4 - core index']
  #allocation1 [shape = 'u32[144,128]{1,0:T(1,128)}', space=vmem, size = 0x12000, scoped, tag = 'internal scratch']
  %s0 = inlined_call_operand.hbm [shape: f32[2,4], index: 0, kind: input, shape index: {}]
  %s1 = inlined_call_operand.hbm [shape: f32[8,512], index: 1, kind: input, shape index: {}]
  %s2 = inlined_call_operand.hbm [shape: f32[128,512], index: 2, kind: input, shape index: {}]
  %s3 = inlined_call_operand.vmem [shape: f32[1,512], index: 3, kind: input, shape index: {}]
  %s4 = inlined_call_operand.hbm [shape: f32[128,128], index: 4, kind: input, shape index: {}]
  %s5 = inlined_call_operand.vmem [shape: f32[1,128], index: 5, kind: input, shape index: {}]
  %s6 = inlined_call_operand.hbm [shape: f32[16,128], index: 6, kind: output, shape index: {0}]
  %s7 = inlined_call_operand.hbm [shape: f32[2,128], index: 7, kind: output, shape index: {1}]
  %8 = xla_tuple %s6, %s7
  %s9 = sld [smem:[#allocation0]]
  $region58: #{tpu_custom_call.1} parent=0
    _
  %s11 = ssub.s32 1, %s9
  %s12 = scalar_select 0, %s11, %s9
  $region1: #{tpu_custom_call.1} parent=0
    #allocation2 [shape = 'u8[1024]{0}', space=vmem, size = 0x400, scoped, tag = 'input window, operand 0, single buffered']
    #allocation3 [shape = 's32[1]{0}', space=sflag, size = 0x4, scoped, tag = 'scoped memory for tpu_custom_call.1']
    #allocation4 [shape = 's32[1]{0}', space=sflag, size = 0x4, scoped, tag = 'scoped memory for tpu_custom_call.1']
    #allocation5 [shape = 'u8[16384]{0}', space=vmem, size = 0x4000, scoped, tag = 'input window, operand 1, single buffered']
    #allocation6 [shape = 's32[1]{0}', space=sflag, size = 0x4, scoped, tag = 'scoped memory for tpu_custom_call.1']
    #allocation7 [shape = 'u8[262144]{0}', space=vmem, size = 0x40000, scoped, tag = 'input window, operand 2, single buffered']
    #allocation8 [shape = 'u8[65536]{0}', space=vmem, size = 0x10000, scoped, tag = 'input window, operand 4, single buffered']
    #allocation9 [shape = 's32[1]{0}', space=sflag, size = 0x4, scoped, tag = 'scoped memory for tpu_custom_call.1']
    #allocation10 [shape = 'u8[8192]{0}', space=vmem, size = 0x2000, scoped, tag = 'output window, operand 0, single buffered']
    #allocation11 [shape = 'u8[1024]{0}', space=vmem, size = 0x400, scoped, tag = 'output window, operand 1, single buffered']
    #allocation12 [shape = 's32[1]{0}', space=sflag, size = 0x4, scoped, tag = 'scoped memory for tpu_custom_call.1']
    %13 = vsyncpa [#allocation3], 0
    %14 = vsyncpa [#allocation6], 0
    %15 = vsyncpa [#allocation9], 0
    %16 = vsyncpa [#allocation4], 0
    %17 = vsyncpa [#allocation12], 0
    // Predicated region
    $region2: #{tpu_custom_call.1} parent=1 // pred_check
      _
    $region3: #{tpu_custom_call.1} parent=1 // pred_check_branch
      %19 = sbr.rel (0) target = $region5
    $region4: #{tpu_custom_call.1} parent=1 // pred_region
      %s21 = ssub.s32 32, 32
      %22 = vsyncadd [#allocation3], %s21
      %s24 = sshll.u32 [#allocation2], 4
      %s25 = int_to_ptr.vmem [resolvable:$true] %s24
      %27 = dma.hbm_to_vmem [thread:$0]  %s0, 32, %s25, [#allocation3]
    $region5: #{tpu_custom_call.1} parent=1 // pred_fallthru
      _
    // Predicated region
    $region6: #{tpu_custom_call.1} parent=1 // pred_check
      _
    $region7: #{tpu_custom_call.1} parent=1 // pred_check_branch
      %29 = sbr.rel (0) target = $region9
    $region8: #{tpu_custom_call.1} parent=1 // pred_region
      %s31 = ssub.s32 512, 512
      %32 = vsyncadd [#allocation6], %s31
      %s34 = sshll.u32 [#allocation5], 4
      %s35 = int_to_ptr.vmem [resolvable:$true] %s34
      %37 = dma.hbm_to_vmem [thread:$0]  %s1, 512, %s35, [#allocation6]
    $region9: #{tpu_custom_call.1} parent=1 // pred_fallthru
      _
    // Predicated region
    $region10: #{tpu_custom_call.1} parent=1 // pred_check
      _
    $region11: #{tpu_custom_call.1} parent=1 // pred_check_branch
      %39 = sbr.rel (0) target = $region13
    $region12: #{tpu_custom_call.1} parent=1 // pred_region
      %s41 = ssub.s32 8192, 8192
      %42 = vsyncadd [#allocation6], %s41
      %s43 = sshll.u32 [#allocation7], 4
      %s44 = int_to_ptr.vmem [resolvable:$true] %s43
      %49 = dma.hbm_to_vmem [thread:$0]  %s2, 8192, %s44, [#allocation6], 512, 512, 32
    $region13: #{tpu_custom_call.1} parent=1 // pred_fallthru
      _
    // Predicated region
    $region14: #{tpu_custom_call.1} parent=1 // pred_check
      _
    $region15: #{tpu_custom_call.1} parent=1 // pred_check_branch
      %51 = sbr.rel (0) target = $region17
    $region16: #{tpu_custom_call.1} parent=1 // pred_region
      _
    $region17: #{tpu_custom_call.1} parent=1 // pred_fallthru
      _
    // Predicated region
    $region18: #{tpu_custom_call.1} parent=1 // pred_check
      _
    $region19: #{tpu_custom_call.1} parent=1 // pred_check_branch
      %53 = sbr.rel (0) target = $region21
    $region20: #{tpu_custom_call.1} parent=1 // pred_region
      %s55 = ssub.s32 2048, 2048
      %56 = vsyncadd [#allocation9], %s55
      %s57 = sshll.u32 [#allocation8], 4
      %s58 = int_to_ptr.vmem [resolvable:$true] %s57
      %63 = dma.hbm_to_vmem [thread:$0]  %s4, 2048, %s58, [#allocation9], 128, 128, 8
    $region21: #{tpu_custom_call.1} parent=1 // pred_fallthru
      _
    // Predicated region
    $region22: #{tpu_custom_call.1} parent=1 // pred_check
      _
    $region23: #{tpu_custom_call.1} parent=1 // pred_check_branch
      %65 = sbr.rel (0) target = $region25
    $region24: #{tpu_custom_call.1} parent=1 // pred_region
      _
    $region25: #{tpu_custom_call.1} parent=1 // pred_fallthru
      _
    // Predicated region
    $region26: #{tpu_custom_call.1} parent=1 // pred_check
      _
    $region27: #{tpu_custom_call.1} parent=1 // pred_check_branch
      %67 = sbr.rel (0) target = $region29
    $region28: #{tpu_custom_call.1} parent=1 // pred_region
      %68 = dma.done [#allocation3], 32
    $region29: #{tpu_custom_call.1} parent=1 // pred_fallthru
      _
    // Predicated region
    $region30: #{tpu_custom_call.1} parent=1 // pred_check
      _
    $region31: #{tpu_custom_call.1} parent=1 // pred_check_branch
      %70 = sbr.rel (0) target = $region33
    $region32: #{tpu_custom_call.1} parent=1 // pred_region
      %71 = dma.done [#allocation6], 512
    $region33: #{tpu_custom_call.1} parent=1 // pred_fallthru
      _
    // Predicated region
    $region34: #{tpu_custom_call.1} parent=1 // pred_check
      _
    $region35: #{tpu_custom_call.1} parent=1 // pred_check_branch
      %73 = sbr.rel (0) target = $region37
    $region36: #{tpu_custom_call.1} parent=1 // pred_region
      %74 = dma.done [#allocation6], 8192
    $region37: #{tpu_custom_call.1} parent=1 // pred_fallthru
      _
    // Predicated region
    $region38: #{tpu_custom_call.1} parent=1 // pred_check
      _
    $region39: #{tpu_custom_call.1} parent=1 // pred_check_branch
      %76 = sbr.rel (0) target = $region41
    $region40: #{tpu_custom_call.1} parent=1 // pred_region
      %77 = dma.done [#allocation9], 2048
    $region41: #{tpu_custom_call.1} parent=1 // pred_fallthru
      _
    %v79 = vld [vmem:[#allocation7] sm:$0xff]
    %v80 = vld [vmem:[#allocation7 + $0x8] sm:$0xff]
    %v81 = vld [vmem:[#allocation7 + $0x10] sm:$0xff]
    %v82 = vld [vmem:[#allocation7 + $0x18] sm:$0xff]
    %v83 = vld [vmem:[#allocation7 + $0x20] sm:$0xff]
    %v84 = vld [vmem:[#allocation7 + $0x28] sm:$0xff]
    %v85 = vld [vmem:[#allocation7 + $0x30] sm:$0xff]
    %v86 = vld [vmem:[#allocation7 + $0x38] sm:$0xff]
    %v87 = vld [vmem:[#allocation7 + $0x40] sm:$0xff]
    %v88 = vld [vmem:[#allocation7 + $0x48] sm:$0xff]
    %v89 = vld [vmem:[#allocation7 + $0x50] sm:$0xff]
    %v90 = vld [vmem:[#allocation7 + $0x58] sm:$0xff]
    %v91 = vld [vmem:[#allocation7 + $0x60] sm:$0xff]
    %v92 = vld [vmem:[#allocation7 + $0x68] sm:$0xff]
    %v93 = vld [vmem:[#allocation7 + $0x70] sm:$0xff]
    %v94 = vld [vmem:[#allocation7 + $0x78] sm:$0xff]
    %v95 = vld [vmem:[#allocation7 + $0x80] sm:$0xff]
    %v96 = vld [vmem:[#allocation7 + $0x88] sm:$0xff]
    %v97 = vld [vmem:[#allocation7 + $0x90] sm:$0xff]
    %v98 = vld [vmem:[#allocation7 + $0x98] sm:$0xff]
    %v99 = vld [vmem:[#allocation7 + $0xa0] sm:$0xff]
    %v100 = vld [vmem:[#allocation7 + $0xa8] sm:$0xff]
    %v101 = vld [vmem:[#allocation7 + $0xb0] sm:$0xff]
    %v102 = vld [vmem:[#allocation7 + $0xb8] sm:$0xff]
    %v103 = vld [vmem:[#allocation7 + $0xc0] sm:$0xff]
    %v104 = vld [vmem:[#allocation7 + $0xc8] sm:$0xff]
    %v105 = vld [vmem:[#allocation7 + $0xd0] sm:$0xff]
    %v106 = vld [vmem:[#allocation7 + $0xd8] sm:$0xff]
    %v107 = vld [vmem:[#allocation7 + $0xe0] sm:$0xff]
    %v108 = vld [vmem:[#allocation7 + $0xe8] sm:$0xff]
    %v109 = vld [vmem:[#allocation7 + $0xf0] sm:$0xff]
    %v110 = vld [vmem:[#allocation7 + $0xf8] sm:$0xff]
    %v111 = vld [vmem:[#allocation7 + $0x100] sm:$0xff]
    %v112 = vld [vmem:[#allocation7 + $0x108] sm:$0xff]
    %v113 = vld [vmem:[#allocation7 + $0x110] sm:$0xff]
    %v114 = vld [vmem:[#allocation7 + $0x118] sm:$0xff]
    %v115 = vld [vmem:[#allocation7 + $0x120] sm:$0xff]
    %v116 = vld [vmem:[#allocation7 + $0x128] sm:$0xff]
    %v117 = vld [vmem:[#allocation7 + $0x130] sm:$0xff]
    %v118 = vld [vmem:[#allocation7 + $0x138] sm:$0xff]
    %v119 = vld [vmem:[#allocation7 + $0x140] sm:$0xff]
    %v120 = vld [vmem:[#allocation7 + $0x148] sm:$0xff]
    %v121 = vld [vmem:[#allocation7 + $0x150] sm:$0xff]
    %v122 = vld [vmem:[#allocation7 + $0x158] sm:$0xff]
    %v123 = vld [vmem:[#allocation7 + $0x160] sm:$0xff]
    %v124 = vld [vmem:[#allocation7 + $0x168] sm:$0xff]
    %v125 = vld [vmem:[#allocation7 + $0x170] sm:$0xff]
    %v126 = vld [vmem:[#allocation7 + $0x178] sm:$0xff]
    %v127 = vld [vmem:[#allocation7 + $0x180] sm:$0xff]
    %v128 = vld [vmem:[#allocation7 + $0x188] sm:$0xff]
    %v129 = vld [vmem:[#allocation7 + $0x190] sm:$0xff]
    %v130 = vld [vmem:[#allocation7 + $0x198] sm:$0xff]
    %v131 = vld [vmem:[#allocation7 + $0x1a0] sm:$0xff]
    %v132 = vld [vmem:[#allocation7 + $0x1a8] sm:$0xff]
    %v133 = vld [vmem:[#allocation7 + $0x1b0] sm:$0xff]
    %v134 = vld [vmem:[#allocation7 + $0x1b8] sm:$0xff]
    %v135 = vld [vmem:[#allocation7 + $0x1c0] sm:$0xff]
    %v136 = vld [vmem:[#allocation7 + $0x1c8] sm:$0xff]
    %v137 = vld [vmem:[#allocation7 + $0x1d0] sm:$0xff]
    %v138 = vld [vmem:[#allocation7 + $0x1d8] sm:$0xff]
    %v139 = vld [vmem:[#allocation7 + $0x1e0] sm:$0xff]
    %v140 = vld [vmem:[#allocation7 + $0x1e8] sm:$0xff]
    %v141 = vld [vmem:[#allocation7 + $0x1f0] sm:$0xff]
    %v142 = vld [vmem:[#allocation7 + $0x1f8] sm:$0xff]
    %v143 = vpack.c.bf16 %v83, %v79
    %v144 = vpack.c.bf16 %v84, %v80
    %v145 = vpack.c.bf16 %v85, %v81
    %v146 = vpack.c.bf16 %v86, %v82
    %v147 = vpack.c.bf16 %v91, %v87
    %v148 = vpack.c.bf16 %v92, %v88
    %v149 = vpack.c.bf16 %v93, %v89
    %v150 = vpack.c.bf16 %v94, %v90
    %v151 = vpack.c.bf16 %v99, %v95
    %v152 = vpack.c.bf16 %v100, %v96
    %v153 = vpack.c.bf16 %v101, %v97
    %v154 = vpack.c.bf16 %v102, %v98
    %v155 = vpack.c.bf16 %v107, %v103
    %v156 = vpack.c.bf16 %v108, %v104
    %v157 = vpack.c.bf16 %v109, %v105
    %v158 = vpack.c.bf16 %v110, %v106
    %v159 = vpack.c.bf16 %v115, %v111
    %v160 = vpack.c.bf16 %v116, %v112
    %v161 = vpack.c.bf16 %v117, %v113
    %v162 = vpack.c.bf16 %v118, %v114
    %v163 = vpack.c.bf16 %v123, %v119
    %v164 = vpack.c.bf16 %v124, %v120
    %v165 = vpack.c.bf16 %v125, %v121
    %v166 = vpack.c.bf16 %v126, %v122
    %v167 = vpack.c.bf16 %v131, %v127
    %v168 = vpack.c.bf16 %v132, %v128
    %v169 = vpack.c.bf16 %v133, %v129
    %v170 = vpack.c.bf16 %v134, %v130
    %v171 = vpack.c.bf16 %v139, %v135
    %v172 = vpack.c.bf16 %v140, %v136
    %v173 = vpack.c.bf16 %v141, %v137
    %v174 = vpack.c.bf16 %v142, %v138
    %v175 = vld [vmem:[#allocation8] sm:$0xff]
    %v176 = vld [vmem:[#allocation8 + $0x8] sm:$0xff]
    %v177 = vld [vmem:[#allocation8 + $0x10] sm:$0xff]
    %v178 = vld [vmem:[#allocation8 + $0x18] sm:$0xff]
    %v179 = vld [vmem:[#allocation8 + $0x20] sm:$0xff]
    %v180 = vld [vmem:[#allocation8 + $0x28] sm:$0xff]
    %v181 = vld [vmem:[#allocation8 + $0x30] sm:$0xff]
    %v182 = vld [vmem:[#allocation8 + $0x38] sm:$0xff]
    %v183 = vld [vmem:[#allocation8 + $0x40] sm:$0xff]
    %v184 = vld [vmem:[#allocation8 + $0x48] sm:$0xff]
    %v185 = vld [vmem:[#allocation8 + $0x50] sm:$0xff]
    %v186 = vld [vmem:[#allocation8 + $0x58] sm:$0xff]
    %v187 = vld [vmem:[#allocation8 + $0x60] sm:$0xff]
    %v188 = vld [vmem:[#allocation8 + $0x68] sm:$0xff]
    %v189 = vld [vmem:[#allocation8 + $0x70] sm:$0xff]
    %v190 = vld [vmem:[#allocation8 + $0x78] sm:$0xff]
    %v191 = vpack.c.bf16 %v176, %v175
    %v192 = vpack.c.bf16 %v178, %v177
    %v193 = vpack.c.bf16 %v180, %v179
    %v194 = vpack.c.bf16 %v182, %v181
    %v195 = vpack.c.bf16 %v184, %v183
    %v196 = vpack.c.bf16 %v186, %v185
    %v197 = vpack.c.bf16 %v188, %v187
    %v198 = vpack.c.bf16 %v190, %v189
    %v199 = vld [vmem:[#allocation2] sm:$0x3]
    %v200 = vld [vmem:[#allocation5] sm:$0xff]
    %v201 = vld [vmem:[#allocation5 + $0x8] sm:$0xff]
    %v202 = vld [vmem:[#allocation5 + $0x10] sm:$0xff]
    %v203 = vld [vmem:[#allocation5 + $0x18] sm:$0xff]
    %v204 = vld [vmem:[%s3] sm:$0xf]
    %v206 = vlaneseq
    %v207 = vshrl.u32 %v206, 7
    %v208 = vsub.s32 0, %v207
    %v209 = vrot.slane %v204, %v208
    %v210 = vlaneseq
    %v211 = vshrl.u32 %v210, 7
    %v212 = vsub.s32 1, %v211
    %v213 = vrot.slane %v204, %v212
    %v214 = vlaneseq
    %v215 = vshrl.u32 %v214, 7
    %v216 = vsub.s32 2, %v215
    %v217 = vrot.slane %v204, %v216
    %v218 = vlaneseq
    %v219 = vshrl.u32 %v218, 7
    %v220 = vsub.s32 3, %v219
    %v221 = vrot.slane %v204, %v220
    %227 = vset.pattern.permute.xlu0 0
    %228 = vperm.xlu0 %227, %v199
    %v229 = vpop.permute.xlu0 %228
    %v231 = vlaneseq
    %v232 = vshrl.u32 %v231, 7
    %v233 = vsub.s32 0, %v232
    %v234 = vrot.slane %v200, %v233
    %v235 = vlaneseq
    %v236 = vshrl.u32 %v235, 7
    %v237 = vsub.s32 0, %v236
    %v238 = vrot.slane %v201, %v237
    %v239 = vlaneseq
    %v240 = vshrl.u32 %v239, 7
    %v241 = vsub.s32 0, %v240
    %v242 = vrot.slane %v202, %v241
    %v243 = vlaneseq
    %v244 = vshrl.u32 %v243, 7
    %v245 = vsub.s32 0, %v244
    %v246 = vrot.slane %v203, %v245
    %v247 = vmul.f32 %v229, %v234
    %v248 = vmul.f32 %v229, %v238
    %v249 = vmul.f32 %v229, %v242
    %v250 = vmul.f32 %v229, %v246
    %v251 = vadd.f32 %v209, %v247
    %v252 = vadd.f32 %v213, %v248
    %v253 = vadd.f32 %v217, %v249
    %v254 = vadd.f32 %v221, %v250
    %255 = vset.pattern.permute.xlu0 1
    %256 = vperm.xlu0 %255, %v199
    %v257 = vpop.permute.xlu0 %256
    %v259 = vlaneseq
    %v260 = vshrl.u32 %v259, 7
    %v261 = vsub.s32 1, %v260
    %v262 = vrot.slane %v200, %v261
    %v263 = vlaneseq
    %v264 = vshrl.u32 %v263, 7
    %v265 = vsub.s32 1, %v264
    %v266 = vrot.slane %v201, %v265
    %v267 = vlaneseq
    %v268 = vshrl.u32 %v267, 7
    %v269 = vsub.s32 1, %v268
    %v270 = vrot.slane %v202, %v269
    %v271 = vlaneseq
    %v272 = vshrl.u32 %v271, 7
    %v273 = vsub.s32 1, %v272
    %v274 = vrot.slane %v203, %v273
    %v275 = vmul.f32 %v257, %v262
    %v276 = vmul.f32 %v257, %v266
    %v277 = vmul.f32 %v257, %v270
    %v278 = vmul.f32 %v257, %v274
    %v279 = vadd.f32 %v251, %v275
    %v280 = vadd.f32 %v252, %v276
    %v281 = vadd.f32 %v253, %v277
    %v282 = vadd.f32 %v254, %v278
    %283 = vset.pattern.permute.xlu0 2
    %284 = vperm.xlu0 %283, %v199
    %v285 = vpop.permute.xlu0 %284
    %v287 = vlaneseq
    %v288 = vshrl.u32 %v287, 7
    %v289 = vsub.s32 2, %v288
    %v290 = vrot.slane %v200, %v289
    %v291 = vlaneseq
    %v292 = vshrl.u32 %v291, 7
    %v293 = vsub.s32 2, %v292
    %v294 = vrot.slane %v201, %v293
    %v295 = vlaneseq
    %v296 = vshrl.u32 %v295, 7
    %v297 = vsub.s32 2, %v296
    %v298 = vrot.slane %v202, %v297
    %v299 = vlaneseq
    %v300 = vshrl.u32 %v299, 7
    %v301 = vsub.s32 2, %v300
    %v302 = vrot.slane %v203, %v301
    %v303 = vmul.f32 %v285, %v290
    %v304 = vmul.f32 %v285, %v294
    %v305 = vmul.f32 %v285, %v298
    %v306 = vmul.f32 %v285, %v302
    %v307 = vadd.f32 %v279, %v303
    %v308 = vadd.f32 %v280, %v304
    %v309 = vadd.f32 %v281, %v305
    %v310 = vadd.f32 %v282, %v306
    %311 = vset.pattern.permute.xlu0 3
    %312 = vperm.xlu0 %311, %v199
    %v313 = vpop.permute.xlu0 %312
    %v315 = vlaneseq
    %v316 = vshrl.u32 %v315, 7
    %v317 = vsub.s32 3, %v316
    %v318 = vrot.slane %v200, %v317
    %v319 = vlaneseq
    %v320 = vshrl.u32 %v319, 7
    %v321 = vsub.s32 3, %v320
    %v322 = vrot.slane %v201, %v321
    %v323 = vlaneseq
    %v324 = vshrl.u32 %v323, 7
    %v325 = vsub.s32 3, %v324
    %v326 = vrot.slane %v202, %v325
    %v327 = vlaneseq
    %v328 = vshrl.u32 %v327, 7
    %v329 = vsub.s32 3, %v328
    %v330 = vrot.slane %v203, %v329
    %v331 = vmul.f32 %v313, %v318
    %v332 = vmul.f32 %v313, %v322
    %v333 = vmul.f32 %v313, %v326
    %v334 = vmul.f32 %v313, %v330
    %v335 = vadd.f32 %v307, %v331
    %v336 = vadd.f32 %v308, %v332
    %v337 = vadd.f32 %v309, %v333
    %v338 = vadd.f32 %v310, %v334
    %v339 = vmul.f32 %v335, 0.5
    %v340 = vtanh.pop %v339
    %v341 = vmul.f32 %v340, 0.5
    %v342 = vadd.f32 %v341, 0.5
    %v343 = vtanh.pop %v337
    %v344 = vmul.f32 %v338, 0.5
    %v345 = vtanh.pop %v344
    %v346 = vmul.f32 %v345, 0.5
    %v347 = vadd.f32 %v346, 0.5
    %v348 = vmul.f32 %v342, %v343
    %v349 = vtanh.pop %v348
    %v350 = vmul.f32 %v347, %v349
    %v351 = vpack.c.bf16 %v350, %v350
    %352 = vmatprep.subr.bf16.mxu0 %v144
    %353 = vmatpush1.bf16.msra.mxu0 %v143
    %354 = vmatprep.subr.bf16.mxu0 %v148
    %355 = vmatpush1.bf16.msra.mxu0 %v147
    %356 = vmatprep.subr.bf16.mxu0 %v152
    %357 = vmatpush1.bf16.msra.mxu0 %v151
    %358 = vmatprep.subr.bf16.mxu0 %v156
    %359 = vmatpush1.bf16.msra.mxu0 %v155
    %360 = vmatprep.subr.bf16.mxu0 %v160
    %361 = vmatpush1.bf16.msra.mxu0 %v159
    %362 = vmatprep.subr.bf16.mxu0 %v164
    %363 = vmatpush1.bf16.msra.mxu0 %v163
    %364 = vmatprep.subr.bf16.mxu0 %v168
    %365 = vmatpush1.bf16.msra.mxu0 %v167
    %366 = vmatprep.subr.bf16.mxu0 %v172
    %367 = vmatpush1.bf16.msra.mxu0 %v171
    %368 = vmatprep.subr.bf16.mxu0 0
    %369 = vmatpush1.bf16.msra.mxu0 0
    %370 = vmatprep.subr.bf16.mxu0 0
    %371 = vmatpush1.bf16.msra.mxu0 0
    %372 = vmatprep.subr.bf16.mxu0 0
    %373 = vmatpush1.bf16.msra.mxu0 0
    %374 = vmatprep.subr.bf16.mxu0 0
    %375 = vmatpush1.bf16.msra.mxu0 0
    %376 = vmatprep.subr.bf16.mxu0 0
    %377 = vmatpush1.bf16.msra.mxu0 0
    %378 = vmatprep.subr.bf16.mxu0 0
    %379 = vmatpush1.bf16.msra.mxu0 0
    %380 = vmatprep.subr.bf16.mxu0 0
    %381 = vmatpush1.bf16.msra.mxu0 0
    %382 = vmatprep.subr.bf16.mxu0 0
    %383 = vmatpush1.bf16.msra.mxu0 0
    %384 = vmatprep.mubr.bf16.mxu0 0
    %385 = vmatmul.mubr.bf16.gmra.mrb[0].mxu0 %v351
    %v386 = vpop.f32.mrb[0].mxu0
    %v387 = vadd.f32 0.0, %v386
    %v388 = vpop.f32.mrb[0].mxu0
    %v389 = vadd.f32 0.0, %v388
    %v390 = vpop.f32.mrb[0].mxu0
    %v391 = vpop.f32.mrb[0].mxu0
    %392 = vdwg.mxu0
    %393 = vmatprep.subr.bf16.mxu0 %v146
    %394 = vmatpush1.bf16.msra.mxu0 %v145
    %395 = vmatprep.subr.bf16.mxu0 %v150
    %396 = vmatpush1.bf16.msra.mxu0 %v149
    %397 = vmatprep.subr.bf16.mxu0 %v154
    %398 = vmatpush1.bf16.msra.mxu0 %v153
    %399 = vmatprep.subr.bf16.mxu0 %v158
    %400 = vmatpush1.bf16.msra.mxu0 %v157
    %401 = vmatprep.subr.bf16.mxu0 %v162
    %402 = vmatpush1.bf16.msra.mxu0 %v161
    %403 = vmatprep.subr.bf16.mxu0 %v166
    %404 = vmatpush1.bf16.msra.mxu0 %v165
    %405 = vmatprep.subr.bf16.mxu0 %v170
    %406 = vmatpush1.bf16.msra.mxu0 %v169
    %407 = vmatprep.subr.bf16.mxu0 %v174
    %408 = vmatpush1.bf16.msra.mxu0 %v173
    %409 = vmatprep.subr.bf16.mxu0 0
    %410 = vmatpush1.bf16.msra.mxu0 0
    %411 = vmatprep.subr.bf16.mxu0 0
    %412 = vmatpush1.bf16.msra.mxu0 0
    %413 = vmatprep.subr.bf16.mxu0 0
    %414 = vmatpush1.bf16.msra.mxu0 0
    %415 = vmatprep.subr.bf16.mxu0 0
    %416 = vmatpush1.bf16.msra.mxu0 0
    %417 = vmatprep.subr.bf16.mxu0 0
    %418 = vmatpush1.bf16.msra.mxu0 0
    %419 = vmatprep.subr.bf16.mxu0 0
    %420 = vmatpush1.bf16.msra.mxu0 0
    %421 = vmatprep.subr.bf16.mxu0 0
    %422 = vmatpush1.bf16.msra.mxu0 0
    %423 = vmatprep.subr.bf16.mxu0 0
    %424 = vmatpush1.bf16.msra.mxu0 0
    %425 = vmatprep.mubr.bf16.mxu0 0
    %426 = vmatmul.mubr.bf16.gmra.mrb[0].mxu0 %v351
    %v427 = vpop.f32.mrb[0].mxu0
    %v428 = vadd.f32 0.0, %v427
    %v429 = vpop.f32.mrb[0].mxu0
    %v430 = vadd.f32 0.0, %v429
    %v431 = vpop.f32.mrb[0].mxu0
    %v432 = vpop.f32.mrb[0].mxu0
    %433 = vdwg.mxu0
    %v434 = vadd.f32 %v335, %v387
    %v435 = vadd.f32 %v336, %v389
    %v436 = vadd.f32 %v337, %v428
    %v437 = vadd.f32 %v338, %v430
    %v438 = vmul.f32 %v434, 0.5
    %v439 = vtanh.pop %v438
    %v440 = vmul.f32 %v439, 0.5
    %v441 = vadd.f32 %v440, 0.5
    %v442 = vmul.f32 %v435, 0.5
    %v443 = vtanh.pop %v442
    %v444 = vmul.f32 %v443, 0.5
    %v445 = vadd.f32 %v444, 0.5
    %v446 = vtanh.pop %v436
    %v447 = vmul.f32 %v437, 0.5
    %v448 = vtanh.pop %v447
    %v449 = vmul.f32 %v448, 0.5
    %v450 = vadd.f32 %v449, 0.5
    %v451 = vmul.f32 %v445, %v348
    %v452 = vmul.f32 %v441, %v446
    %v453 = vadd.f32 %v451, %v452
    %v454 = vtanh.pop %v453
    %v455 = vmul.f32 %v450, %v454
    %v456 = vpack.c.bf16 %v455, %v455
    %457 = vmatprep.subr.bf16.mxu0 %v144
    %458 = vmatpush1.bf16.msra.mxu0 %v143
    %459 = vmatprep.subr.bf16.mxu0 %v148
    %460 = vmatpush1.bf16.msra.mxu0 %v147
    %461 = vmatprep.subr.bf16.mxu0 %v152
    %462 = vmatpush1.bf16.msra.mxu0 %v151
    %463 = vmatprep.subr.bf16.mxu0 %v156
    %464 = vmatpush1.bf16.msra.mxu0 %v155
    %465 = vmatprep.subr.bf16.mxu0 %v160
    %466 = vmatpush1.bf16.msra.mxu0 %v159
    %467 = vmatprep.subr.bf16.mxu0 %v164
    %468 = vmatpush1.bf16.msra.mxu0 %v163
    %469 = vmatprep.subr.bf16.mxu0 %v168
    %470 = vmatpush1.bf16.msra.mxu0 %v167
    %471 = vmatprep.subr.bf16.mxu0 %v172
    %472 = vmatpush1.bf16.msra.mxu0 %v171
    %473 = vmatprep.subr.bf16.mxu0 0
    %474 = vmatpush1.bf16.msra.mxu0 0
    %475 = vmatprep.subr.bf16.mxu0 0
    %476 = vmatpush1.bf16.msra.mxu0 0
    %477 = vmatprep.subr.bf16.mxu0 0
    %478 = vmatpush1.bf16.msra.mxu0 0
    %479 = vmatprep.subr.bf16.mxu0 0
    %480 = vmatpush1.bf16.msra.mxu0 0
    %481 = vmatprep.subr.bf16.mxu0 0
    %482 = vmatpush1.bf16.msra.mxu0 0
    %483 = vmatprep.subr.bf16.mxu0 0
    %484 = vmatpush1.bf16.msra.mxu0 0
    %485 = vmatprep.subr.bf16.mxu0 0
    %486 = vmatpush1.bf16.msra.mxu0 0
    %487 = vmatprep.subr.bf16.mxu0 0
    %488 = vmatpush1.bf16.msra.mxu0 0
    %489 = vmatprep.mubr.bf16.mxu0 0
    %490 = vmatmul.mubr.bf16.gmra.mrb[0].mxu0 %v456
    %v491 = vpop.f32.mrb[0].mxu0
    %v492 = vadd.f32 0.0, %v491
    %v493 = vpop.f32.mrb[0].mxu0
    %v494 = vadd.f32 0.0, %v493
    %v495 = vpop.f32.mrb[0].mxu0
    %v496 = vpop.f32.mrb[0].mxu0
    %497 = vdwg.mxu0
    %498 = vmatprep.subr.bf16.mxu0 %v146
    %499 = vmatpush1.bf16.msra.mxu0 %v145
    %500 = vmatprep.subr.bf16.mxu0 %v150
    %501 = vmatpush1.bf16.msra.mxu0 %v149
    %502 = vmatprep.subr.bf16.mxu0 %v154
    %503 = vmatpush1.bf16.msra.mxu0 %v153
    %504 = vmatprep.subr.bf16.mxu0 %v158
    %505 = vmatpush1.bf16.msra.mxu0 %v157
    %506 = vmatprep.subr.bf16.mxu0 %v162
    %507 = vmatpush1.bf16.msra.mxu0 %v161
    %508 = vmatprep.subr.bf16.mxu0 %v166
    %509 = vmatpush1.bf16.msra.mxu0 %v165
    %510 = vmatprep.subr.bf16.mxu0 %v170
    %511 = vmatpush1.bf16.msra.mxu0 %v169
    %512 = vmatprep.subr.bf16.mxu0 %v174
    %513 = vmatpush1.bf16.msra.mxu0 %v173
    %514 = vmatprep.subr.bf16.mxu0 0
    %515 = vmatpush1.bf16.msra.mxu0 0
    %516 = vmatprep.subr.bf16.mxu0 0
    %517 = vmatpush1.bf16.msra.mxu0 0
    %518 = vmatprep.subr.bf16.mxu0 0
    %519 = vmatpush1.bf16.msra.mxu0 0
    %520 = vmatprep.subr.bf16.mxu0 0
    %521 = vmatpush1.bf16.msra.mxu0 0
    %522 = vmatprep.subr.bf16.mxu0 0
    %523 = vmatpush1.bf16.msra.mxu0 0
    %524 = vmatprep.subr.bf16.mxu0 0
    %525 = vmatpush1.bf16.msra.mxu0 0
    %526 = vmatprep.subr.bf16.mxu0 0
    %527 = vmatpush1.bf16.msra.mxu0 0
    %528 = vmatprep.subr.bf16.mxu0 0
    %529 = vmatpush1.bf16.msra.mxu0 0
    %530 = vmatprep.mubr.bf16.mxu0 0
    %531 = vmatmul.mubr.bf16.gmra.mrb[0].mxu0 %v456
    %v532 = vpop.f32.mrb[0].mxu0
    %v533 = vadd.f32 0.0, %v532
    %v534 = vpop.f32.mrb[0].mxu0
    %v535 = vadd.f32 0.0, %v534
    %v536 = vpop.f32.mrb[0].mxu0
    %v537 = vpop.f32.mrb[0].mxu0
    %538 = vdwg.mxu0
    %v539 = vadd.f32 %v335, %v492
    %v540 = vadd.f32 %v336, %v494
    %v541 = vadd.f32 %v337, %v533
    %v542 = vadd.f32 %v338, %v535
    %v543 = vmul.f32 %v539, 0.5
    %v544 = vtanh.pop %v543
    %v545 = vmul.f32 %v544, 0.5
    %v546 = vadd.f32 %v545, 0.5
    %v547 = vmul.f32 %v540, 0.5
    %v548 = vtanh.pop %v547
    %v549 = vmul.f32 %v548, 0.5
    %v550 = vadd.f32 %v549, 0.5
    %v551 = vtanh.pop %v541
    %v552 = vmul.f32 %v542, 0.5
    %v553 = vtanh.pop %v552
    %v554 = vmul.f32 %v553, 0.5
    %v555 = vadd.f32 %v554, 0.5
    %v556 = vmul.f32 %v550, %v453
    %v557 = vmul.f32 %v546, %v551
    %v558 = vadd.f32 %v556, %v557
    %v559 = vtanh.pop %v558
    %v560 = vmul.f32 %v555, %v559
    %v561 = vpack.c.bf16 %v560, %v560
    %562 = vmatprep.subr.bf16.mxu0 %v144
    %563 = vmatpush1.bf16.msra.mxu0 %v143
    %564 = vmatprep.subr.bf16.mxu0 %v148
    %565 = vmatpush1.bf16.msra.mxu0 %v147
    %566 = vmatprep.subr.bf16.mxu0 %v152
    %567 = vmatpush1.bf16.msra.mxu0 %v151
    %568 = vmatprep.subr.bf16.mxu0 %v156
    %569 = vmatpush1.bf16.msra.mxu0 %v155
    %570 = vmatprep.subr.bf16.mxu0 %v160
    %571 = vmatpush1.bf16.msra.mxu0 %v159
    %572 = vmatprep.subr.bf16.mxu0 %v164
    %573 = vmatpush1.bf16.msra.mxu0 %v163
    %574 = vmatprep.subr.bf16.mxu0 %v168
    %575 = vmatpush1.bf16.msra.mxu0 %v167
    %576 = vmatprep.subr.bf16.mxu0 %v172
    %577 = vmatpush1.bf16.msra.mxu0 %v171
    %578 = vmatprep.subr.bf16.mxu0 0
    %579 = vmatpush1.bf16.msra.mxu0 0
    %580 = vmatprep.subr.bf16.mxu0 0
    %581 = vmatpush1.bf16.msra.mxu0 0
    %582 = vmatprep.subr.bf16.mxu0 0
    %583 = vmatpush1.bf16.msra.mxu0 0
    %584 = vmatprep.subr.bf16.mxu0 0
    %585 = vmatpush1.bf16.msra.mxu0 0
    %586 = vmatprep.subr.bf16.mxu0 0
    %587 = vmatpush1.bf16.msra.mxu0 0
    %588 = vmatprep.subr.bf16.mxu0 0
    %589 = vmatpush1.bf16.msra.mxu0 0
    %590 = vmatprep.subr.bf16.mxu0 0
    %591 = vmatpush1.bf16.msra.mxu0 0
    %592 = vmatprep.subr.bf16.mxu0 0
    %593 = vmatpush1.bf16.msra.mxu0 0
    %594 = vmatprep.mubr.bf16.mxu0 0
    %595 = vmatmul.mubr.bf16.gmra.mrb[0].mxu0 %v561
    %v596 = vpop.f32.mrb[0].mxu0
    %v597 = vadd.f32 0.0, %v596
    %v598 = vpop.f32.mrb[0].mxu0
    %v599 = vadd.f32 0.0, %v598
    %v600 = vpop.f32.mrb[0].mxu0
    %v601 = vpop.f32.mrb[0].mxu0
    %602 = vdwg.mxu0
    %603 = vmatprep.subr.bf16.mxu0 %v146
    %604 = vmatpush1.bf16.msra.mxu0 %v145
    %605 = vmatprep.subr.bf16.mxu0 %v150
    %606 = vmatpush1.bf16.msra.mxu0 %v149
    %607 = vmatprep.subr.bf16.mxu0 %v154
    %608 = vmatpush1.bf16.msra.mxu0 %v153
    %609 = vmatprep.subr.bf16.mxu0 %v158
    %610 = vmatpush1.bf16.msra.mxu0 %v157
    %611 = vmatprep.subr.bf16.mxu0 %v162
    %612 = vmatpush1.bf16.msra.mxu0 %v161
    %613 = vmatprep.subr.bf16.mxu0 %v166
    %614 = vmatpush1.bf16.msra.mxu0 %v165
    %615 = vmatprep.subr.bf16.mxu0 %v170
    %616 = vmatpush1.bf16.msra.mxu0 %v169
    %617 = vmatprep.subr.bf16.mxu0 %v174
    %618 = vmatpush1.bf16.msra.mxu0 %v173
    %619 = vmatprep.subr.bf16.mxu0 0
    %620 = vmatpush1.bf16.msra.mxu0 0
    %621 = vmatprep.subr.bf16.mxu0 0
    %622 = vmatpush1.bf16.msra.mxu0 0
    %623 = vmatprep.subr.bf16.mxu0 0
    %624 = vmatpush1.bf16.msra.mxu0 0
    %625 = vmatprep.subr.bf16.mxu0 0
    %626 = vmatpush1.bf16.msra.mxu0 0
    %627 = vmatprep.subr.bf16.mxu0 0
    %628 = vmatpush1.bf16.msra.mxu0 0
    %629 = vmatprep.subr.bf16.mxu0 0
    %630 = vmatpush1.bf16.msra.mxu0 0
    %631 = vmatprep.subr.bf16.mxu0 0
    %632 = vmatpush1.bf16.msra.mxu0 0
    %633 = vmatprep.subr.bf16.mxu0 0
    %634 = vmatpush1.bf16.msra.mxu0 0
    %635 = vmatprep.mubr.bf16.mxu0 0
    %636 = vmatmul.mubr.bf16.gmra.mrb[0].mxu0 %v561
    %v637 = vpop.f32.mrb[0].mxu0
    %v638 = vadd.f32 0.0, %v637
    %v639 = vpop.f32.mrb[0].mxu0
    %v640 = vadd.f32 0.0, %v639
    %v641 = vpop.f32.mrb[0].mxu0
    %v642 = vpop.f32.mrb[0].mxu0
    %643 = vdwg.mxu0
    %v644 = vadd.f32 %v335, %v597
    %v645 = vadd.f32 %v336, %v599
    %v646 = vadd.f32 %v337, %v638
    %v647 = vadd.f32 %v338, %v640
    %v648 = vmul.f32 %v644, 0.5
    %v649 = vtanh.pop %v648
    %v650 = vmul.f32 %v649, 0.5
    %v651 = vadd.f32 %v650, 0.5
    %v652 = vmul.f32 %v645, 0.5
    %v653 = vtanh.pop %v652
    %v654 = vmul.f32 %v653, 0.5
    %v655 = vadd.f32 %v654, 0.5
    %v656 = vtanh.pop %v646
    %v657 = vmul.f32 %v647, 0.5
    %v658 = vtanh.pop %v657
    %v659 = vmul.f32 %v658, 0.5
    %v660 = vadd.f32 %v659, 0.5
    %v661 = vmul.f32 %v655, %v558
    %v662 = vmul.f32 %v651, %v656
    %v663 = vadd.f32 %v661, %v662
    %v664 = vtanh.pop %v663
    %v665 = vmul.f32 %v660, %v664
    %v666 = vpack.c.bf16 %v665, %v665
    %667 = vmatprep.subr.bf16.mxu0 %v144
    %668 = vmatpush1.bf16.msra.mxu0 %v143
    %669 = vmatprep.subr.bf16.mxu0 %v148
    %670 = vmatpush1.bf16.msra.mxu0 %v147
    %671 = vmatprep.subr.bf16.mxu0 %v152
    %672 = vmatpush1.bf16.msra.mxu0 %v151
    %673 = vmatprep.subr.bf16.mxu0 %v156
    %674 = vmatpush1.bf16.msra.mxu0 %v155
    %675 = vmatprep.subr.bf16.mxu0 %v160
    %676 = vmatpush1.bf16.msra.mxu0 %v159
    %677 = vmatprep.subr.bf16.mxu0 %v164
    %678 = vmatpush1.bf16.msra.mxu0 %v163
    %679 = vmatprep.subr.bf16.mxu0 %v168
    %680 = vmatpush1.bf16.msra.mxu0 %v167
    %681 = vmatprep.subr.bf16.mxu0 %v172
    %682 = vmatpush1.bf16.msra.mxu0 %v171
    %683 = vmatprep.subr.bf16.mxu0 0
    %684 = vmatpush1.bf16.msra.mxu0 0
    %685 = vmatprep.subr.bf16.mxu0 0
    %686 = vmatpush1.bf16.msra.mxu0 0
    %687 = vmatprep.subr.bf16.mxu0 0
    %688 = vmatpush1.bf16.msra.mxu0 0
    %689 = vmatprep.subr.bf16.mxu0 0
    %690 = vmatpush1.bf16.msra.mxu0 0
    %691 = vmatprep.subr.bf16.mxu0 0
    %692 = vmatpush1.bf16.msra.mxu0 0
    %693 = vmatprep.subr.bf16.mxu0 0
    %694 = vmatpush1.bf16.msra.mxu0 0
    %695 = vmatprep.subr.bf16.mxu0 0
    %696 = vmatpush1.bf16.msra.mxu0 0
    %697 = vmatprep.subr.bf16.mxu0 0
    %698 = vmatpush1.bf16.msra.mxu0 0
    %699 = vmatprep.mubr.bf16.mxu0 0
    %700 = vmatmul.mubr.bf16.gmra.mrb[0].mxu0 %v666
    %v701 = vpop.f32.mrb[0].mxu0
    %v702 = vadd.f32 0.0, %v701
    %v703 = vpop.f32.mrb[0].mxu0
    %v704 = vadd.f32 0.0, %v703
    %v705 = vpop.f32.mrb[0].mxu0
    %v706 = vpop.f32.mrb[0].mxu0
    %707 = vdwg.mxu0
    %708 = vmatprep.subr.bf16.mxu0 %v146
    %709 = vmatpush1.bf16.msra.mxu0 %v145
    %710 = vmatprep.subr.bf16.mxu0 %v150
    %711 = vmatpush1.bf16.msra.mxu0 %v149
    %712 = vmatprep.subr.bf16.mxu0 %v154
    %713 = vmatpush1.bf16.msra.mxu0 %v153
    %714 = vmatprep.subr.bf16.mxu0 %v158
    %715 = vmatpush1.bf16.msra.mxu0 %v157
    %716 = vmatprep.subr.bf16.mxu0 %v162
    %717 = vmatpush1.bf16.msra.mxu0 %v161
    %718 = vmatprep.subr.bf16.mxu0 %v166
    %719 = vmatpush1.bf16.msra.mxu0 %v165
    %720 = vmatprep.subr.bf16.mxu0 %v170
    %721 = vmatpush1.bf16.msra.mxu0 %v169
    %722 = vmatprep.subr.bf16.mxu0 %v174
    %723 = vmatpush1.bf16.msra.mxu0 %v173
    %724 = vmatprep.subr.bf16.mxu0 0
    %725 = vmatpush1.bf16.msra.mxu0 0
    %726 = vmatprep.subr.bf16.mxu0 0
    %727 = vmatpush1.bf16.msra.mxu0 0
    %728 = vmatprep.subr.bf16.mxu0 0
    %729 = vmatpush1.bf16.msra.mxu0 0
    %730 = vmatprep.subr.bf16.mxu0 0
    %731 = vmatpush1.bf16.msra.mxu0 0
    %732 = vmatprep.subr.bf16.mxu0 0
    %733 = vmatpush1.bf16.msra.mxu0 0
    %734 = vmatprep.subr.bf16.mxu0 0
    %735 = vmatpush1.bf16.msra.mxu0 0
    %736 = vmatprep.subr.bf16.mxu0 0
    %737 = vmatpush1.bf16.msra.mxu0 0
    %738 = vmatprep.subr.bf16.mxu0 0
    %739 = vmatpush1.bf16.msra.mxu0 0
    %740 = vmatprep.mubr.bf16.mxu0 0
    %741 = vmatmul.mubr.bf16.gmra.mrb[0].mxu0 %v666
    %v742 = vpop.f32.mrb[0].mxu0
    %v743 = vadd.f32 0.0, %v742
    %v744 = vpop.f32.mrb[0].mxu0
    %v745 = vadd.f32 0.0, %v744
    %v746 = vpop.f32.mrb[0].mxu0
    %v747 = vpop.f32.mrb[0].mxu0
    %748 = vdwg.mxu0
    %v749 = vadd.f32 %v335, %v702
    %v750 = vadd.f32 %v336, %v704
    %v751 = vadd.f32 %v337, %v743
    %v752 = vadd.f32 %v338, %v745
    %v753 = vmul.f32 %v749, 0.5
    %v754 = vtanh.pop %v753
    %v755 = vmul.f32 %v754, 0.5
    %v756 = vadd.f32 %v755, 0.5
    %v757 = vmul.f32 %v750, 0.5
    %v758 = vtanh.pop %v757
    %v759 = vmul.f32 %v758, 0.5
    %v760 = vadd.f32 %v759, 0.5
    %v761 = vtanh.pop %v751
    %v762 = vmul.f32 %v752, 0.5
    %v763 = vtanh.pop %v762
    %v764 = vmul.f32 %v763, 0.5
    %v765 = vadd.f32 %v764, 0.5
    %v766 = vmul.f32 %v760, %v663
    %v767 = vmul.f32 %v756, %v761
    %v768 = vadd.f32 %v766, %v767
    %v769 = vtanh.pop %v768
    %v770 = vmul.f32 %v765, %v769
    %v771 = vpack.c.bf16 %v770, %v770
    %772 = vmatprep.subr.bf16.mxu0 %v144
    %773 = vmatpush1.bf16.msra.mxu0 %v143
    %774 = vmatprep.subr.bf16.mxu0 %v148
    %775 = vmatpush1.bf16.msra.mxu0 %v147
    %776 = vmatprep.subr.bf16.mxu0 %v152
    %777 = vmatpush1.bf16.msra.mxu0 %v151
    %778 = vmatprep.subr.bf16.mxu0 %v156
    %779 = vmatpush1.bf16.msra.mxu0 %v155
    %780 = vmatprep.subr.bf16.mxu0 %v160
    %781 = vmatpush1.bf16.msra.mxu0 %v159
    %782 = vmatprep.subr.bf16.mxu0 %v164
    %783 = vmatpush1.bf16.msra.mxu0 %v163
    %784 = vmatprep.subr.bf16.mxu0 %v168
    %785 = vmatpush1.bf16.msra.mxu0 %v167
    %786 = vmatprep.subr.bf16.mxu0 %v172
    %787 = vmatpush1.bf16.msra.mxu0 %v171
    %788 = vmatprep.subr.bf16.mxu0 0
    %789 = vmatpush1.bf16.msra.mxu0 0
    %790 = vmatprep.subr.bf16.mxu0 0
    %791 = vmatpush1.bf16.msra.mxu0 0
    %792 = vmatprep.subr.bf16.mxu0 0
    %793 = vmatpush1.bf16.msra.mxu0 0
    %794 = vmatprep.subr.bf16.mxu0 0
    %795 = vmatpush1.bf16.msra.mxu0 0
    %796 = vmatprep.subr.bf16.mxu0 0
    %797 = vmatpush1.bf16.msra.mxu0 0
    %798 = vmatprep.subr.bf16.mxu0 0
    %799 = vmatpush1.bf16.msra.mxu0 0
    %800 = vmatprep.subr.bf16.mxu0 0
    %801 = vmatpush1.bf16.msra.mxu0 0
    %802 = vmatprep.subr.bf16.mxu0 0
    %803 = vmatpush1.bf16.msra.mxu0 0
    %804 = vmatprep.mubr.bf16.mxu0 0
    %805 = vmatmul.mubr.bf16.gmra.mrb[0].mxu0 %v771
    %v806 = vpop.f32.mrb[0].mxu0
    %v807 = vadd.f32 0.0, %v806
    %v808 = vpop.f32.mrb[0].mxu0
    %v809 = vadd.f32 0.0, %v808
    %v810 = vpop.f32.mrb[0].mxu0
    %v811 = vpop.f32.mrb[0].mxu0
    %812 = vdwg.mxu0
    %813 = vmatprep.subr.bf16.mxu0 %v146
    %814 = vmatpush1.bf16.msra.mxu0 %v145
    %815 = vmatprep.subr.bf16.mxu0 %v150
    %816 = vmatpush1.bf16.msra.mxu0 %v149
    %817 = vmatprep.subr.bf16.mxu0 %v154
    %818 = vmatpush1.bf16.msra.mxu0 %v153
    %819 = vmatprep.subr.bf16.mxu0 %v158
    %820 = vmatpush1.bf16.msra.mxu0 %v157
    %821 = vmatprep.subr.bf16.mxu0 %v162
    %822 = vmatpush1.bf16.msra.mxu0 %v161
    %823 = vmatprep.subr.bf16.mxu0 %v166
    %824 = vmatpush1.bf16.msra.mxu0 %v165
    %825 = vmatprep.subr.bf16.mxu0 %v170
    %826 = vmatpush1.bf16.msra.mxu0 %v169
    %827 = vmatprep.subr.bf16.mxu0 %v174
    %828 = vmatpush1.bf16.msra.mxu0 %v173
    %829 = vmatprep.subr.bf16.mxu0 0
    %830 = vmatpush1.bf16.msra.mxu0 0
    %831 = vmatprep.subr.bf16.mxu0 0
    %832 = vmatpush1.bf16.msra.mxu0 0
    %833 = vmatprep.subr.bf16.mxu0 0
    %834 = vmatpush1.bf16.msra.mxu0 0
    %835 = vmatprep.subr.bf16.mxu0 0
    %836 = vmatpush1.bf16.msra.mxu0 0
    %837 = vmatprep.subr.bf16.mxu0 0
    %838 = vmatpush1.bf16.msra.mxu0 0
    %839 = vmatprep.subr.bf16.mxu0 0
    %840 = vmatpush1.bf16.msra.mxu0 0
    %841 = vmatprep.subr.bf16.mxu0 0
    %842 = vmatpush1.bf16.msra.mxu0 0
    %843 = vmatprep.subr.bf16.mxu0 0
    %844 = vmatpush1.bf16.msra.mxu0 0
    %845 = vmatprep.mubr.bf16.mxu0 0
    %846 = vmatmul.mubr.bf16.gmra.mrb[0].mxu0 %v771
    %v847 = vpop.f32.mrb[0].mxu0
    %v848 = vadd.f32 0.0, %v847
    %v849 = vpop.f32.mrb[0].mxu0
    %v850 = vadd.f32 0.0, %v849
    %v851 = vpop.f32.mrb[0].mxu0
    %v852 = vpop.f32.mrb[0].mxu0
    %853 = vdwg.mxu0
    %v854 = vadd.f32 %v335, %v807
    %v855 = vadd.f32 %v336, %v809
    %v856 = vadd.f32 %v337, %v848
    %v857 = vadd.f32 %v338, %v850
    %v858 = vmul.f32 %v854, 0.5
    %v859 = vtanh.pop %v858
    %v860 = vmul.f32 %v859, 0.5
    %v861 = vadd.f32 %v860, 0.5
    %v862 = vmul.f32 %v855, 0.5
    %v863 = vtanh.pop %v862
    %v864 = vmul.f32 %v863, 0.5
    %v865 = vadd.f32 %v864, 0.5
    %v866 = vtanh.pop %v856
    %v867 = vmul.f32 %v857, 0.5
    %v868 = vtanh.pop %v867
    %v869 = vmul.f32 %v868, 0.5
    %v870 = vadd.f32 %v869, 0.5
    %v871 = vmul.f32 %v865, %v768
    %v872 = vmul.f32 %v861, %v866
    %v873 = vadd.f32 %v871, %v872
    %v874 = vtanh.pop %v873
    %v875 = vmul.f32 %v870, %v874
    %v876 = vpack.c.bf16 %v875, %v875
    %877 = vmatprep.subr.bf16.mxu0 %v144
    %878 = vmatpush1.bf16.msra.mxu0 %v143
    %879 = vmatprep.subr.bf16.mxu0 %v148
    %880 = vmatpush1.bf16.msra.mxu0 %v147
    %881 = vmatprep.subr.bf16.mxu0 %v152
    %882 = vmatpush1.bf16.msra.mxu0 %v151
    %883 = vmatprep.subr.bf16.mxu0 %v156
    %884 = vmatpush1.bf16.msra.mxu0 %v155
    %885 = vmatprep.subr.bf16.mxu0 %v160
    %886 = vmatpush1.bf16.msra.mxu0 %v159
    %887 = vmatprep.subr.bf16.mxu0 %v164
    %888 = vmatpush1.bf16.msra.mxu0 %v163
    %889 = vmatprep.subr.bf16.mxu0 %v168
    %890 = vmatpush1.bf16.msra.mxu0 %v167
    %891 = vmatprep.subr.bf16.mxu0 %v172
    %892 = vmatpush1.bf16.msra.mxu0 %v171
    %893 = vmatprep.subr.bf16.mxu0 0
    %894 = vmatpush1.bf16.msra.mxu0 0
    %895 = vmatprep.subr.bf16.mxu0 0
    %896 = vmatpush1.bf16.msra.mxu0 0
    %897 = vmatprep.subr.bf16.mxu0 0
    %898 = vmatpush1.bf16.msra.mxu0 0
    %899 = vmatprep.subr.bf16.mxu0 0
    %900 = vmatpush1.bf16.msra.mxu0 0
    %901 = vmatprep.subr.bf16.mxu0 0
    %902 = vmatpush1.bf16.msra.mxu0 0
    %903 = vmatprep.subr.bf16.mxu0 0
    %904 = vmatpush1.bf16.msra.mxu0 0
    %905 = vmatprep.subr.bf16.mxu0 0
    %906 = vmatpush1.bf16.msra.mxu0 0
    %907 = vmatprep.subr.bf16.mxu0 0
    %908 = vmatpush1.bf16.msra.mxu0 0
    %909 = vmatprep.mubr.bf16.mxu0 0
    %910 = vmatmul.mubr.bf16.gmra.mrb[0].mxu0 %v876
    %v911 = vpop.f32.mrb[0].mxu0
    %v912 = vadd.f32 0.0, %v911
    %v913 = vpop.f32.mrb[0].mxu0
    %v914 = vadd.f32 0.0, %v913
    %v915 = vpop.f32.mrb[0].mxu0
    %v916 = vpop.f32.mrb[0].mxu0
    %917 = vdwg.mxu0
    %918 = vmatprep.subr.bf16.mxu0 %v146
    %919 = vmatpush1.bf16.msra.mxu0 %v145
    %920 = vmatprep.subr.bf16.mxu0 %v150
    %921 = vmatpush1.bf16.msra.mxu0 %v149
    %922 = vmatprep.subr.bf16.mxu0 %v154
    %923 = vmatpush1.bf16.msra.mxu0 %v153
    %924 = vmatprep.subr.bf16.mxu0 %v158
    %925 = vmatpush1.bf16.msra.mxu0 %v157
    %926 = vmatprep.subr.bf16.mxu0 %v162
    %927 = vmatpush1.bf16.msra.mxu0 %v161
    %928 = vmatprep.subr.bf16.mxu0 %v166
    %929 = vmatpush1.bf16.msra.mxu0 %v165
    %930 = vmatprep.subr.bf16.mxu0 %v170
    %931 = vmatpush1.bf16.msra.mxu0 %v169
    %932 = vmatprep.subr.bf16.mxu0 %v174
    %933 = vmatpush1.bf16.msra.mxu0 %v173
    %934 = vmatprep.subr.bf16.mxu0 0
    %935 = vmatpush1.bf16.msra.mxu0 0
    %936 = vmatprep.subr.bf16.mxu0 0
    %937 = vmatpush1.bf16.msra.mxu0 0
    %938 = vmatprep.subr.bf16.mxu0 0
    %939 = vmatpush1.bf16.msra.mxu0 0
    %940 = vmatprep.subr.bf16.mxu0 0
    %941 = vmatpush1.bf16.msra.mxu0 0
    %942 = vmatprep.subr.bf16.mxu0 0
    %943 = vmatpush1.bf16.msra.mxu0 0
    %944 = vmatprep.subr.bf16.mxu0 0
    %945 = vmatpush1.bf16.msra.mxu0 0
    %946 = vmatprep.subr.bf16.mxu0 0
    %947 = vmatpush1.bf16.msra.mxu0 0
    %948 = vmatprep.subr.bf16.mxu0 0
    %949 = vmatpush1.bf16.msra.mxu0 0
    %950 = vmatprep.mubr.bf16.mxu0 0
    %951 = vmatmul.mubr.bf16.gmra.mrb[0].mxu0 %v876
    %v952 = vpop.f32.mrb[0].mxu0
    %v953 = vadd.f32 0.0, %v952
    %v954 = vpop.f32.mrb[0].mxu0
    %v955 = vadd.f32 0.0, %v954
    %v956 = vpop.f32.mrb[0].mxu0
    %v957 = vpop.f32.mrb[0].mxu0
    %958 = vdwg.mxu0
    %v959 = vadd.f32 %v335, %v912
    %v960 = vadd.f32 %v336, %v914
    %v961 = vadd.f32 %v337, %v953
    %v962 = vadd.f32 %v338, %v955
    %v963 = vmul.f32 %v959, 0.5
    %v964 = vtanh.pop %v963
    %v965 = vmul.f32 %v964, 0.5
    %v966 = vadd.f32 %v965, 0.5
    %v967 = vmul.f32 %v960, 0.5
    %v968 = vtanh.pop %v967
    %v969 = vmul.f32 %v968, 0.5
    %v970 = vadd.f32 %v969, 0.5
    %v971 = vtanh.pop %v961
    %v972 = vmul.f32 %v962, 0.5
    %v973 = vtanh.pop %v972
    %v974 = vmul.f32 %v973, 0.5
    %v975 = vadd.f32 %v974, 0.5
    %v976 = vmul.f32 %v970, %v873
    %v977 = vmul.f32 %v966, %v971
    %v978 = vadd.f32 %v976, %v977
    %v979 = vtanh.pop %v978
    %v980 = vmul.f32 %v975, %v979
    %v981 = vpack.c.bf16 %v980, %v980
    %982 = vmatprep.subr.bf16.mxu0 %v144
    %983 = vmatpush1.bf16.msra.mxu0 %v143
    %984 = vmatprep.subr.bf16.mxu0 %v148
    %985 = vmatpush1.bf16.msra.mxu0 %v147
    %986 = vmatprep.subr.bf16.mxu0 %v152
    %987 = vmatpush1.bf16.msra.mxu0 %v151
    %988 = vmatprep.subr.bf16.mxu0 %v156
    %989 = vmatpush1.bf16.msra.mxu0 %v155
    %990 = vmatprep.subr.bf16.mxu0 %v160
    %991 = vmatpush1.bf16.msra.mxu0 %v159
    %992 = vmatprep.subr.bf16.mxu0 %v164
    %993 = vmatpush1.bf16.msra.mxu0 %v163
    %994 = vmatprep.subr.bf16.mxu0 %v168
    %995 = vmatpush1.bf16.msra.mxu0 %v167
    %996 = vmatprep.subr.bf16.mxu0 %v172
    %997 = vmatpush1.bf16.msra.mxu0 %v171
    %998 = vmatprep.subr.bf16.mxu0 0
    %999 = vmatpush1.bf16.msra.mxu0 0
    %1000 = vmatprep.subr.bf16.mxu0 0
    %1001 = vmatpush1.bf16.msra.mxu0 0
    %1002 = vmatprep.subr.bf16.mxu0 0
    %1003 = vmatpush1.bf16.msra.mxu0 0
    %1004 = vmatprep.subr.bf16.mxu0 0
    %1005 = vmatpush1.bf16.msra.mxu0 0
    %1006 = vmatprep.subr.bf16.mxu0 0
    %1007 = vmatpush1.bf16.msra.mxu0 0
    %1008 = vmatprep.subr.bf16.mxu0 0
    %1009 = vmatpush1.bf16.msra.mxu0 0
    %1010 = vmatprep.subr.bf16.mxu0 0
    %1011 = vmatpush1.bf16.msra.mxu0 0
    %1012 = vmatprep.subr.bf16.mxu0 0
    %1013 = vmatpush1.bf16.msra.mxu0 0
    %1014 = vmatprep.mubr.bf16.mxu0 0
    %1015 = vmatmul.mubr.bf16.gmra.mrb[0].mxu0 %v981
    %v1016 = vpop.f32.mrb[0].mxu0
    %v1017 = vadd.f32 0.0, %v1016
    %v1018 = vpop.f32.mrb[0].mxu0
    %v1019 = vadd.f32 0.0, %v1018
    %v1020 = vpop.f32.mrb[0].mxu0
    %v1021 = vpop.f32.mrb[0].mxu0
    %1022 = vdwg.mxu0
    %1023 = vmatprep.subr.bf16.mxu0 %v146
    %1024 = vmatpush1.bf16.msra.mxu0 %v145
    %1025 = vmatprep.subr.bf16.mxu0 %v150
    %1026 = vmatpush1.bf16.msra.mxu0 %v149
    %1027 = vmatprep.subr.bf16.mxu0 %v154
    %1028 = vmatpush1.bf16.msra.mxu0 %v153
    %1029 = vmatprep.subr.bf16.mxu0 %v158
    %1030 = vmatpush1.bf16.msra.mxu0 %v157
    %1031 = vmatprep.subr.bf16.mxu0 %v162
    %1032 = vmatpush1.bf16.msra.mxu0 %v161
    %1033 = vmatprep.subr.bf16.mxu0 %v166
    %1034 = vmatpush1.bf16.msra.mxu0 %v165
    %1035 = vmatprep.subr.bf16.mxu0 %v170
    %1036 = vmatpush1.bf16.msra.mxu0 %v169
    %1037 = vmatprep.subr.bf16.mxu0 %v174
    %1038 = vmatpush1.bf16.msra.mxu0 %v173
    %1039 = vmatprep.subr.bf16.mxu0 0
    %1040 = vmatpush1.bf16.msra.mxu0 0
    %1041 = vmatprep.subr.bf16.mxu0 0
    %1042 = vmatpush1.bf16.msra.mxu0 0
    %1043 = vmatprep.subr.bf16.mxu0 0
    %1044 = vmatpush1.bf16.msra.mxu0 0
    %1045 = vmatprep.subr.bf16.mxu0 0
    %1046 = vmatpush1.bf16.msra.mxu0 0
    %1047 = vmatprep.subr.bf16.mxu0 0
    %1048 = vmatpush1.bf16.msra.mxu0 0
    %1049 = vmatprep.subr.bf16.mxu0 0
    %1050 = vmatpush1.bf16.msra.mxu0 0
    %1051 = vmatprep.subr.bf16.mxu0 0
    %1052 = vmatpush1.bf16.msra.mxu0 0
    %1053 = vmatprep.subr.bf16.mxu0 0
    %1054 = vmatpush1.bf16.msra.mxu0 0
    %1055 = vmatprep.mubr.bf16.mxu0 0
    %1056 = vmatmul.mubr.bf16.gmra.mrb[0].mxu0 %v981
    %v1057 = vpop.f32.mrb[0].mxu0
    %v1058 = vadd.f32 0.0, %v1057
    %v1059 = vpop.f32.mrb[0].mxu0
    %v1060 = vadd.f32 0.0, %v1059
    %v1061 = vpop.f32.mrb[0].mxu0
    %v1062 = vpop.f32.mrb[0].mxu0
    %1063 = vdwg.mxu0
    %v1064 = vadd.f32 %v335, %v1017
    %v1065 = vadd.f32 %v336, %v1019
    %v1066 = vadd.f32 %v337, %v1058
    %v1067 = vadd.f32 %v338, %v1060
    %v1068 = vmul.f32 %v1064, 0.5
    %v1069 = vtanh.pop %v1068
    %v1070 = vmul.f32 %v1069, 0.5
    %v1071 = vadd.f32 %v1070, 0.5
    %v1072 = vmul.f32 %v1065, 0.5
    %v1073 = vtanh.pop %v1072
    %v1074 = vmul.f32 %v1073, 0.5
    %v1075 = vadd.f32 %v1074, 0.5
    %v1076 = vtanh.pop %v1066
    %v1077 = vmul.f32 %v1067, 0.5
    %v1078 = vtanh.pop %v1077
    %v1079 = vmul.f32 %v1078, 0.5
    %v1080 = vadd.f32 %v1079, 0.5
    %v1081 = vmul.f32 %v1075, %v978
    %v1082 = vmul.f32 %v1071, %v1076
    %v1083 = vadd.f32 %v1081, %v1082
    %v1084 = vtanh.pop %v1083
    %v1085 = vmul.f32 %v1080, %v1084
    %1086 = vst [vmem:[#allocation11] sm:$0x3] %v1085
    %v1088 = vrot.slane %v455, 6
    %v1091 = vrot.slane %v560, 4
    %v1094 = vrot.slane %v665, 2
    %v1097 = vrot.slane %v875, 6
    %v1100 = vrot.slane %v980, 4
    %v1103 = vrot.slane %v1085, 2
    %vm1105 = vcmask 1041408
    %v1106 = vsel %vm1105, %v350, %v1088
    %vm1107 = vcmask 1043456
    %v1108 = vsel %vm1107, %v1106, %v1091
    %vm1109 = vcmask 1045504
    %v1110 = vsel %vm1109, %v1108, %v1094
    %v1111 = vsel %vm1105, %v770, %v1097
    %v1112 = vsel %vm1107, %v1111, %v1100
    %v1113 = vsel %vm1109, %v1112, %v1103
    %v1114 = vpack.c.bf16 %v1113, %v1110
    %v1115 = vld [vmem:[%s5] sm:$0x1]
    %v1117 = vlaneseq
    %v1118 = vshrl.u32 %v1117, 7
    %v1119 = vsub.s32 0, %v1118
    %v1120 = vrot.slane %v1115, %v1119
    %1122 = vmatprep.subr.bf16.mxu0 0
    %1123 = vmatpush1.bf16.msra.mxu0 %v191
    %1124 = vmatprep.subr.bf16.mxu0 0
    %1125 = vmatpush1.bf16.msra.mxu0 %v192
    %1126 = vmatprep.subr.bf16.mxu0 0
    %1127 = vmatpush1.bf16.msra.mxu0 %v193
    %1128 = vmatprep.subr.bf16.mxu0 0
    %1129 = vmatpush1.bf16.msra.mxu0 %v194
    %1130 = vmatprep.subr.bf16.mxu0 0
    %1131 = vmatpush1.bf16.msra.mxu0 %v195
    %1132 = vmatprep.subr.bf16.mxu0 0
    %1133 = vmatpush1.bf16.msra.mxu0 %v196
    %1134 = vmatprep.subr.bf16.mxu0 0
    %1135 = vmatpush1.bf16.msra.mxu0 %v197
    %1136 = vmatprep.subr.bf16.mxu0 0
    %1137 = vmatpush1.bf16.msra.mxu0 %v198
    %1138 = vmatprep.subr.bf16.mxu0 0
    %1139 = vmatpush1.bf16.msra.mxu0 0
    %1140 = vmatprep.subr.bf16.mxu0 0
    %1141 = vmatpush1.bf16.msra.mxu0 0
    %1142 = vmatprep.subr.bf16.mxu0 0
    %1143 = vmatpush1.bf16.msra.mxu0 0
    %1144 = vmatprep.subr.bf16.mxu0 0
    %1145 = vmatpush1.bf16.msra.mxu0 0
    %1146 = vmatprep.subr.bf16.mxu0 0
    %1147 = vmatpush1.bf16.msra.mxu0 0
    %1148 = vmatprep.subr.bf16.mxu0 0
    %1149 = vmatpush1.bf16.msra.mxu0 0
    %1150 = vmatprep.subr.bf16.mxu0 0
    %1151 = vmatpush1.bf16.msra.mxu0 0
    %1152 = vmatprep.subr.bf16.mxu0 0
    %1153 = vmatpush1.bf16.msra.mxu0 0
    %1154 = vmatprep.mubr.bf16.mxu0 0
    %1155 = vmatmul.mubr.bf16.gmra.mrb[0].mxu0 %v1114
    %v1156 = vpop.f32.mrb[0].mxu0
    %v1157 = vadd.f32 %v1120, %v1156
    %v1158 = vpop.f32.mrb[0].mxu0
    %v1159 = vpop.f32.mrb[0].mxu0
    %v1160 = vadd.f32 %v1120, %v1159
    %v1161 = vpop.f32.mrb[0].mxu0
    %1162 = vdwg.mxu0
    %1163 = vst [vmem:[#allocation10] sm:$0xff] %v1157
    %1164 = vst [vmem:[#allocation10 + $0x8] sm:$0xff] %v1160
    // Predicated region
    $region42: #{tpu_custom_call.1} parent=1 // pred_check
      _
    $region43: #{tpu_custom_call.1} parent=1 // pred_check_branch
      %1166 = sbr.rel (0) target = $region45
    $region44: #{tpu_custom_call.1} parent=1 // pred_region
      %s1168 = ssub.s32 256, 256
      %1169 = vsyncadd [#allocation4], %s1168
      %s1170 = sshll.u32 [#allocation10], 4
      %s1171 = int_to_ptr.vmem [resolvable:$true] %s1170
      %1176 = dma.vmem_to_hbm [thread:$0]  %s1171, 256, %s6, [#allocation4], 128, 128, 8
    $region45: #{tpu_custom_call.1} parent=1 // pred_fallthru
      _
    // Predicated region
    $region46: #{tpu_custom_call.1} parent=1 // pred_check
      _
    $region47: #{tpu_custom_call.1} parent=1 // pred_check_branch
      %1178 = sbr.rel (0) target = $region49
    $region48: #{tpu_custom_call.1} parent=1 // pred_region
      %s1180 = ssub.s32 32, 32
      %1181 = vsyncadd [#allocation12], %s1180
      %s1183 = sshll.u32 [#allocation11], 4
      %s1184 = int_to_ptr.vmem [resolvable:$true] %s1183
      %1186 = dma.vmem_to_hbm [thread:$0]  %s1184, 32, %s7, [#allocation12]
    $region49: #{tpu_custom_call.1} parent=1 // pred_fallthru
      _
    // Predicated region
    $region50: #{tpu_custom_call.1} parent=1 // pred_check
      _
    $region51: #{tpu_custom_call.1} parent=1 // pred_check_branch
      %1188 = sbr.rel (0) target = $region53
    $region52: #{tpu_custom_call.1} parent=1 // pred_region
      %1189 = dma.done [#allocation4], 256
    $region53: #{tpu_custom_call.1} parent=1 // pred_fallthru
      _
    // Predicated region
    $region54: #{tpu_custom_call.1} parent=1 // pred_check
      _
    $region55: #{tpu_custom_call.1} parent=1 // pred_check_branch
      %1191 = sbr.rel (0) target = $region57
    $region56: #{tpu_custom_call.1} parent=1 // pred_region
      %1192 = dma.done [#allocation12], 32
    $region57: #{tpu_custom_call.1} parent=1 // pred_fallthru
      _
    %1193 = vsyncpa [#allocation3], 1
    %1194 = vsyncpa [#allocation6], 1
    %1195 = vsyncpa [#allocation9], 1
    %1196 = vsyncpa [#allocation4], 1
    %1197 = vsyncpa [#allocation12], 1

</llo_original>
